<compile_context>
chip_gen: v7x
topology: tpu7x:2x2x1
jax: 0.10.0
libtpu: 0.0.40
codegen_flags: <defaults>
</compile_context>

<pallas_src>
import functools

import jax
import jax.numpy as jnp
from jax import lax
from jax.experimental import pallas as pl
from jax.experimental.pallas import tpu as pltpu


def _softmax_over_queries(scores):
    """Softmax over axis 0 (the query index i) of an [i, j] score matrix."""
    p = jnp.exp(scores - jnp.max(scores, axis=0, keepdims=True))
    return p / jnp.sum(p, axis=0, keepdims=True)


def attention_block_kernel(x_ref, w_qkv_ref, b_qkv_ref, wo_ref, bo_ref, o_ref,
                           *, n_heads, d_k, key_tile, mxu_dtype):
    """Attention block for a block of Bt batch elements, channels-first I/O.

    x_ref    : [Bt, C, S]      input block (NCHW flattened)
    w_qkv_ref: [C, 3*Hd]       fused, pre-transposed projection, mxu_dtype
                               (column blocks q|k|v, head-major; scale folded
                                into the Q columns)
    b_qkv_ref: [1, 3*Hd]       fused projection bias (scale folded into Q part), f32
    wo_ref   : [Hd, C]         pre-transposed output weight, mxu_dtype
    bo_ref   : [1, C]          output bias, f32
    o_ref    : [Bt, C, S]
    """
    Bt, C, S = x_ref.shape
    Hd = n_heads * d_k

    # Per-batch [C,S] -> [S,C] transpose (XLU, once per element), then fold the
    # batch into rows so the fused QKV projection is ONE MXU pass with M=Bt*S.
    if Bt == 1:
        xs = x_ref[0].T.astype(jnp.float32)                       # [S, C]
    else:
        xs = jnp.concatenate([x_ref[b].T.astype(jnp.float32) for b in range(Bt)],
                             axis=0)                               # [Bt*S, C]

    qkv = jnp.dot(xs.astype(mxu_dtype), w_qkv_ref[...],
                  preferred_element_type=jnp.float32) + b_qkv_ref[...]   # [Bt*S, 3Hd] f32

    wo = wo_ref[...]                                               # [Hd, C]
    bo = bo_ref[...]                                               # [1, C]

    # dot_general contracting the last (feature) dims: [S_i,d]·[S_j,d] -> [S_i,S_j]
    dn = (((1,), (1,)), ((), ()))

    for b in range(Bt):
        r0 = b * S
        q = qkv[r0:r0 + S, 0:Hd]
        k = qkv[r0:r0 + S, Hd:2 * Hd]
        v = qkv[r0:r0 + S, 2 * Hd:3 * Hd]
        out = xs[r0:r0 + S, :] + bo                                # residual + bias, f32

        if n_heads == 1:
            q_m = q.astype(mxu_dtype)
            if S <= key_tile:
                scores = lax.dot_general(q_m, k.astype(mxu_dtype), dn,
                                         preferred_element_type=jnp.float32)  # [S_i,S_j]
                p = _softmax_over_queries(scores)
                res = jnp.dot(p.astype(mxu_dtype), v.astype(mxu_dtype),
                              preferred_element_type=jnp.float32)             # [S, d_k]
            else:
                # Exact key-axis tiling: softmax is over i, so each j-column
                # block normalizes independently (no online-softmax rescale).
                res = jnp.zeros((S, d_k), jnp.float32)
                for j0 in range(0, S, key_tile):
                    tj = min(key_tile, S - j0)
                    kb = k[j0:j0 + tj, :].astype(mxu_dtype)
                    vb = v[j0:j0 + tj, :].astype(mxu_dtype)
                    sc = lax.dot_general(q_m, kb, dn,
                                         preferred_element_type=jnp.float32)  # [S, tj]
                    p = _softmax_over_queries(sc)
                    res = res + jnp.dot(p.astype(mxu_dtype), vb,
                                        preferred_element_type=jnp.float32)
        else:
            # Head-batched path (head dim leading; avoids unaligned 64-lane slices).
            # TODO(synk): add key-axis tiling here too if n_heads > 1 with large S.
            q3 = q.reshape(S, n_heads, d_k).transpose(1, 0, 2).astype(mxu_dtype)
            k3 = k.reshape(S, n_heads, d_k).transpose(1, 0, 2).astype(mxu_dtype)
            v3 = v.reshape(S, n_heads, d_k).transpose(1, 0, 2).astype(mxu_dtype)
            sc = jnp.einsum('hid,hjd->hij', q3, k3,
                            preferred_element_type=jnp.float32)
            p = jnp.exp(sc - jnp.max(sc, axis=1, keepdims=True))
            p = p / jnp.sum(p, axis=1, keepdims=True)
            r3 = jnp.einsum('hij,hjd->hid', p.astype(mxu_dtype), v3,
                            preferred_element_type=jnp.float32)
            res = r3.transpose(1, 0, 2).reshape(S, Hd)

        out = out + jnp.dot(res.astype(mxu_dtype), wo,
                            preferred_element_type=jnp.float32)
        o_ref[b] = out.T.astype(o_ref.dtype)                       # back to [C, S]


def _pick_batch_block(B, C, S, itemsize):
    """Fold the whole batch into one grid step on single-TC chips (v5e/v6e) so
    per-grid-step overhead is paid once and the QKV matmul sees M=B*S.  Keep
    grid=(B,) with 'parallel' semantics on v7x (2 TCs/chip) or unknown HW."""
    if B <= 1:
        return 1
    if B * C * S * itemsize > (8 << 20):       # keep folded blocks small vs VMEM
        return 1
    try:
        kind = jax.devices()[0].device_kind.lower()
    except Exception:
        return 1
    if ('v5' in kind) or ('v6' in kind):
        return B
    return 1


def attention_block(x, wp, bp, wo, bo, *, n_heads, d_k,
                    batch_block=None, mxu_dtype=jnp.bfloat16):
    """x: [B, C, H, W] (NCHW like the PyTorch module). Returns [B, C, H, W]."""
    B, C, H, W = x.shape
    S = H * W
    Hd = n_heads * d_k
    scale = float(d_k) ** -0.5

    # ---- one-time weight plumbing (outside the kernel) -----------------------
    # PyTorch fused Linear layout: wp is [3*Hd, C] with head-major rows, each
    # head block ordered (q | k | v).  Build a single fused, pre-transposed
    # [C, 3*Hd] weight with column blocks q|k|v (head-major), fold the
    # attention scale into the Q columns/bias, and pre-cast to mxu_dtype.
    wp3 = wp.reshape(n_heads, 3, d_k, C)
    bp3 = bp.reshape(n_heads, 3, d_k)
    wq = wp3[:, 0].reshape(Hd, C) * scale
    wk = wp3[:, 1].reshape(Hd, C)
    wv = wp3[:, 2].reshape(Hd, C)
    w_qkv_t = jnp.concatenate([wq, wk, wv], axis=0).T.astype(mxu_dtype)     # [C, 3Hd]
    b_qkv = jnp.concatenate([bp3[:, 0].reshape(Hd) * scale,
                             bp3[:, 1].reshape(Hd),
                             bp3[:, 2].reshape(Hd)], axis=0
                            ).reshape(1, 3 * Hd).astype(jnp.float32)
    wo_t = wo.T.astype(mxu_dtype)                                            # [Hd, C]
    bo2 = bo.reshape(1, C).astype(jnp.float32)

    if batch_block is None:
        batch_block = _pick_batch_block(B, C, S, x.dtype.itemsize)
    assert B % batch_block == 0
    Bt = batch_block
    grid_b = B // Bt

    # Exact j-tiling kicks in well before the [S,S] f32 score matrix threatens
    # the (v7x-sized) VMEM budget.
    key_tile = S if S <= 1024 else 512

    # NCHW -> [B, C, S] is a pure view (no HBM transpose).
    x_cs = x.reshape(B, C, S)

    kernel = functools.partial(attention_block_kernel, n_heads=n_heads, d_k=d_k,
                               key_tile=key_tile, mxu_dtype=mxu_dtype)

    # ---- scoped-VMEM budget (no arbitrary 4x multiplier, capped vs capacity) --
    fb = 4
    wb = jnp.dtype(mxu_dtype).itemsize
    io_bytes = 2 * 2 * Bt * C * S * x.dtype.itemsize            # double-buffered in+out
    w_bytes = 2 * (C * 3 * Hd + Hd * C) * wb + 2 * (3 * Hd + C) * fb
    inter_bytes = (2 * Bt * S * C + Bt * S * 3 * Hd
                   + 2 * n_heads * S * min(S, key_tile) + 2 * S * Hd) * fb
    need = io_bytes + w_bytes + inter_bytes
    try:
        cap = int(0.7 * pltpu.get_tpu_info().vmem_capacity_bytes)
    except Exception:
        cap = 44 * 1024 * 1024                                   # safe for v7x's 64 MiB
    vmem_limit = max(16 * 1024 * 1024, min(int(1.5 * need), cap))

    cost = pl.CostEstimate(
        flops=int(B * (2 * S * C * 3 * Hd + n_heads * 4 * S * S * d_k + 2 * S * Hd * C)),
        transcendentals=int(B * n_heads * S * S),
        bytes_accessed=int(2 * B * C * S * x.dtype.itemsize
                           + (C * 3 * Hd + Hd * C) * wb + (3 * Hd + C) * fb),
    )

    out = pl.pallas_call(
        kernel,
        out_shape=jax.ShapeDtypeStruct((B, C, S), x.dtype),
        grid_spec=pltpu.PrefetchScalarGridSpec(
            num_scalar_prefetch=0,
            grid=(grid_b,),
            in_specs=[
                pl.BlockSpec((Bt, C, S), lambda b: (b, 0, 0)),
                pl.BlockSpec((C, 3 * Hd), lambda b: (0, 0)),
                pl.BlockSpec((1, 3 * Hd), lambda b: (0, 0)),
                pl.BlockSpec((Hd, C), lambda b: (0, 0)),
                pl.BlockSpec((1, C), lambda b: (0, 0)),
            ],
            out_specs=pl.BlockSpec((Bt, C, S), lambda b: (b, 0, 0)),
        ),
        compiler_params=pltpu.CompilerParams(
            dimension_semantics=("parallel",),
            vmem_limit_bytes=vmem_limit,
        ),
        cost_estimate=cost,
    )(x_cs, w_qkv_t, b_qkv, wo_t, bo2)

    return out.reshape(B, C, H, W)


def attention_block_ref(x, wp, bp, wo, bo, *, n_heads, d_k):
    """Pure-JAX reference mirroring the PyTorch forward exactly (f32)."""
    B, C, H, W = x.shape
    S = H * W
    xs = x.reshape(B, C, S).transpose(0, 2, 1)                  # [B, S, C]
    qkv = xs @ wp.T + bp                                        # [B, S, 3*H*d_k]
    qkv = qkv.reshape(B, S, n_heads, 3 * d_k)
    q, k, v = jnp.split(qkv, 3, axis=-1)
    attn = jnp.einsum('bihd,bjhd->bijh', q, k) * (float(d_k) ** -0.5)
    attn = jax.nn.softmax(attn, axis=1)                         # dim=1 (query axis)
    res = jnp.einsum('bijh,bjhd->bihd', attn, v)
    res = res.reshape(B, S, n_heads * d_k)
    res = res @ wo.T + bo
    res = res + xs
    return res.transpose(0, 2, 1).reshape(B, C, H, W)


if __name__ == "__main__":
    # Small shapes mirroring an attention level inside FFPCell's UNet:
    # AttentionBlock(n_channels=64) -> n_heads=1, d_k=64 (module defaults).
    B, C, H, W = 2, 64, 16, 16
    n_heads, d_k = 1, 64
    # TODO(synk): GroupNorm (self.norm) exists in AttentionBlock.__init__ but is
    # never called in forward(), so no GroupNorm params are created or applied.

    key = jax.random.PRNGKey(0)
    kx, kwp, kbp, kwo, kbo = jax.random.split(key, 5)

    x = jax.random.normal(kx, (B, C, H, W), dtype=jnp.float32)

    # PyTorch Linear layout: weight is [out_features, in_features].
    proj_out = n_heads * d_k * 3
    wp = 0.05 * jax.random.normal(kwp, (proj_out, C), dtype=jnp.float32)
    bp = 0.05 * jax.random.normal(kbp, (proj_out,), dtype=jnp.float32)
    wo = 0.05 * jax.random.normal(kwo, (C, n_heads * d_k), dtype=jnp.float32)
    bo = 0.05 * jax.random.normal(kbo, (C,), dtype=jnp.float32)

    out = attention_block(x, wp, bp, wo, bo, n_heads=n_heads, d_k=d_k)
    out = jax.block_until_ready(out)

    ref = attention_block_ref(x, wp, bp, wo, bo, n_heads=n_heads, d_k=d_k)
    assert out.shape == (B, C, H, W)
    # Tolerance sized for bf16 MXU operands (f32 accumulation); residual path
    # and softmax normalization are exact f32.
    assert jnp.allclose(out, ref, atol=2e-2, rtol=2e-2), "mismatch vs reference"

    print("KERNEL_OK")
</pallas_src>

<mosaic_0001>
module attributes {stable_mosaic.version = 11 : i64} {
  func.func @attention_block_kernel(%arg0: i32, %arg1: memref<1x64x256xf32, #tpu.memory_space<vmem>>, %arg2: memref<64x192xbf16, #tpu.memory_space<vmem>>, %arg3: memref<1x192xf32, #tpu.memory_space<vmem>>, %arg4: memref<64x64xbf16, #tpu.memory_space<vmem>>, %arg5: memref<1x64xf32, #tpu.memory_space<vmem>>, %arg6: memref<1x64x256xf32, #tpu.memory_space<vmem>>) attributes {dimension_semantics = [#tpu.dimension_semantics<parallel>], iteration_bounds = array<i64: 2>, scalar_prefetch = 0 : i64, scratch_operands = 0 : i64, tpu.core_type = #tpu.core_type<tc>, window_params = [{transform_indices = @transform_0, window_bounds = array<i64: 1, 64, 256>}, {pipeline_mode = #tpu.pipeline_mode<synchronous>, transform_indices = @transform_1, window_bounds = array<i64: 64, 192>}, {pipeline_mode = #tpu.pipeline_mode<synchronous>, transform_indices = @transform_2, window_bounds = array<i64: 1, 192>}, {pipeline_mode = #tpu.pipeline_mode<synchronous>, transform_indices = @transform_3, window_bounds = array<i64: 64, 64>}, {pipeline_mode = #tpu.pipeline_mode<synchronous>, transform_indices = @transform_4, window_bounds = array<i64: 1, 64>}, {transform_indices = @transform_5, window_bounds = array<i64: 1, 64, 256>}]} {
    %c0 = arith.constant 0 : index
    %c0_0 = arith.constant 0 : index
    %c0_1 = arith.constant 0 : index
    %0 = vector.load %arg1[%c0, %c0_0, %c0_1] : memref<1x64x256xf32, #tpu.memory_space<vmem>>, vector<1x64x256xf32>
    %1 = vector.shape_cast %0 : vector<1x64x256xf32> to vector<64x256xf32>
    %2 = tpu.transpose %1, [1, 0] : vector<64x256xf32> -> vector<256x64xf32>
    %3 = arith.truncf %2 : vector<256x64xf32> to vector<256x64xbf16>
    %c0_2 = arith.constant 0 : index
    %c0_3 = arith.constant 0 : index
    %4 = vector.load %arg2[%c0_2, %c0_3] : memref<64x192xbf16, #tpu.memory_space<vmem>>, vector<64x192xbf16>
    %cst = arith.constant dense<0.000000e+00> : vector<256x192xf32>
    %5 = tpu.matmul %3, %4, %cst {dimension_numbers = #tpu.dot_dimension_numbers<[1], [0], [0], [1], [0, 0, 1, 1], [], []>} : vector<256x64xbf16>, vector<64x192xbf16>, vector<256x192xf32> -> vector<256x192xf32>
    %c0_4 = arith.constant 0 : index
    %c0_5 = arith.constant 0 : index
    %6 = vector.load %arg3[%c0_4, %c0_5] : memref<1x192xf32, #tpu.memory_space<vmem>>, vector<1x192xf32>
    %7 = vector.broadcast %6 : vector<1x192xf32> to vector<256x192xf32>
    %8 = arith.addf %5, %7 : vector<256x192xf32>
    %c0_6 = arith.constant 0 : index
    %c0_7 = arith.constant 0 : index
    %9 = vector.load %arg4[%c0_6, %c0_7] : memref<64x64xbf16, #tpu.memory_space<vmem>>, vector<64x64xbf16>
    %c0_8 = arith.constant 0 : index
    %c0_9 = arith.constant 0 : index
    %10 = vector.load %arg5[%c0_8, %c0_9] : memref<1x64xf32, #tpu.memory_space<vmem>>, vector<1x64xf32>
    %11 = vector.extract_strided_slice %8 {offsets = [0, 0], sizes = [256, 64], strides = [1, 1]} : vector<256x192xf32> to vector<256x64xf32>
    %12 = vector.extract_strided_slice %8 {offsets = [0, 64], sizes = [256, 64], strides = [1, 1]} : vector<256x192xf32> to vector<256x64xf32>
    %13 = vector.extract_strided_slice %8 {offsets = [0, 128], sizes = [256, 64], strides = [1, 1]} : vector<256x192xf32> to vector<256x64xf32>
    %14 = vector.broadcast %10 : vector<1x64xf32> to vector<256x64xf32>
    %15 = arith.addf %2, %14 : vector<256x64xf32>
    %16 = arith.truncf %11 : vector<256x64xf32> to vector<256x64xbf16>
    %17 = arith.truncf %12 : vector<256x64xf32> to vector<256x64xbf16>
    %cst_10 = arith.constant dense<0.000000e+00> : vector<256x256xf32>
    %18 = tpu.matmul %16, %17, %cst_10 {dimension_numbers = #tpu.dot_dimension_numbers<[1], [1], [0], [0], [0, 0, 1, 0], [], []>} : vector<256x64xbf16>, vector<256x64xbf16>, vector<256x256xf32> -> vector<256x256xf32>
    %cst_11 = arith.constant dense<0xFF800000> : vector<256xf32>
    %19 = vector.multi_reduction <maximumf>, %18, %cst_11 [0] : vector<256x256xf32> to vector<256xf32>
    %20 = vector.shape_cast %19 : vector<256xf32> to vector<1x256xf32>
    %21 = vector.broadcast %20 : vector<1x256xf32> to vector<256x256xf32>
    %22 = arith.subf %18, %21 : vector<256x256xf32>
    %23 = math.exp %22 : vector<256x256xf32>
    %cst_12 = arith.constant dense<0.000000e+00> : vector<256xf32>
    %24 = vector.multi_reduction <add>, %23, %cst_12 [0] : vector<256x256xf32> to vector<256xf32>
    %25 = vector.shape_cast %24 : vector<256xf32> to vector<1x256xf32>
    %26 = vector.broadcast %25 : vector<1x256xf32> to vector<256x256xf32>
    %27 = arith.divf %23, %26 : vector<256x256xf32>
    %28 = arith.truncf %27 : vector<256x256xf32> to vector<256x256xbf16>
    %29 = arith.truncf %13 : vector<256x64xf32> to vector<256x64xbf16>
    %cst_13 = arith.constant dense<0.000000e+00> : vector<256x64xf32>
    %30 = tpu.matmul %28, %29, %cst_13 {dimension_numbers = #tpu.dot_dimension_numbers<[1], [0], [0], [1], [0, 0, 1, 1], [], []>} : vector<256x256xbf16>, vector<256x64xbf16>, vector<256x64xf32> -> vector<256x64xf32>
    %31 = arith.truncf %30 : vector<256x64xf32> to vector<256x64xbf16>
    %cst_14 = arith.constant dense<0.000000e+00> : vector<256x64xf32>
    %32 = tpu.matmul %31, %9, %cst_14 {dimension_numbers = #tpu.dot_dimension_numbers<[1], [0], [0], [1], [0, 0, 1, 1], [], []>} : vector<256x64xbf16>, vector<64x64xbf16>, vector<256x64xf32> -> vector<256x64xf32>
    %33 = arith.addf %15, %32 : vector<256x64xf32>
    %34 = tpu.transpose %33, [1, 0] : vector<256x64xf32> -> vector<64x256xf32>
    %c0_15 = arith.constant 0 : index
    %c0_16 = arith.constant 0 : index
    %c0_17 = arith.constant 0 : index
    %35 = vector.load %arg6[%c0_15, %c0_16, %c0_17] : memref<1x64x256xf32, #tpu.memory_space<vmem>>, vector<1x64x256xf32>
    %36 = vector.shape_cast %35 : vector<1x64x256xf32> to vector<64x256xf32>
    %37 = vector.shape_cast %34 : vector<64x256xf32> to vector<1x64x256xf32>
    tpu.vector_store %arg6[%c0_15, %c0_16, %c0_17], %37 {strides = array<i32>} : memref<1x64x256xf32, #tpu.memory_space<vmem>>, vector<1x64x256xf32>,
    return
  }
  func.func @transform_0(%arg0: i32) -> (i32, i32, i32) {
    %c0_i32 = arith.constant 0 : i32
    %c0_i32_0 = arith.constant 0 : i32
    %c0_i32_1 = arith.constant 0 : i32
    return %arg0, %c0_i32, %c0_i32_0 : i32, i32, i32
  }
  func.func @transform_1(%arg0: i32) -> (i32, i32) {
    %c0_i32 = arith.constant 0 : i32
    %c0_i32_0 = arith.constant 0 : i32
    %c0_i32_1 = arith.constant 0 : i32
    return %c0_i32, %c0_i32_0 : i32, i32
  }
  func.func @transform_2(%arg0: i32) -> (i32, i32) {
    %c0_i32 = arith.constant 0 : i32
    %c0_i32_0 = arith.constant 0 : i32
    %c0_i32_1 = arith.constant 0 : i32
    return %c0_i32, %c0_i32_0 : i32, i32
  }
  func.func @transform_3(%arg0: i32) -> (i32, i32) {
    %c0_i32 = arith.constant 0 : i32
    %c0_i32_0 = arith.constant 0 : i32
    %c0_i32_1 = arith.constant 0 : i32
    return %c0_i32, %c0_i32_0 : i32, i32
  }
  func.func @transform_4(%arg0: i32) -> (i32, i32) {
    %c0_i32 = arith.constant 0 : i32
    %c0_i32_0 = arith.constant 0 : i32
    %c0_i32_1 = arith.constant 0 : i32
    return %c0_i32, %c0_i32_0 : i32, i32
  }
  func.func @transform_5(%arg0: i32) -> (i32, i32, i32) {
    %c0_i32 = arith.constant 0 : i32
    %c0_i32_0 = arith.constant 0 : i32
    %c0_i32_1 = arith.constant 0 : i32
    return %arg0, %c0_i32, %c0_i32_0 : i32, i32, i32
  }
}

</mosaic_0001>

<llo_original>
// kernel: tpu_custom_call.1
$region0: #{tpu_custom_call.1}
  #allocation0 [shape = 'u32[]', space=smem, size = 0x4, offset = 0x4, fixed_abs, tag = 'smem constant byte address 0x4 - core index']
  #allocation1 [shape = 'u32[144,128]{1,0:T(1,128)}', space=vmem, size = 0x12000, scoped, tag = 'internal scratch']
  %s0 = inlined_call_operand.hbm [shape: f32[2,64,256], index: 0, kind: input, shape index: {}]
  %s1 = inlined_call_operand.hbm [shape: bf16[64,192], index: 1, kind: input, shape index: {}]
  %s2 = inlined_call_operand.vmem [shape: f32[1,192], index: 2, kind: input, shape index: {}]
  %s3 = inlined_call_operand.hbm [shape: bf16[64,64], index: 3, kind: input, shape index: {}]
  %s4 = inlined_call_operand.vmem [shape: f32[1,64], index: 4, kind: input, shape index: {}]
  %s5 = inlined_call_operand.hbm [shape: f32[2,64,256], index: 5, kind: output, shape index: {}]
  %s6 = sld [smem:[#allocation0]]
  $region65: #{tpu_custom_call.1} parent=0
    _
  %s8 = ssub.s32 1, %s6
  %s9 = scalar_select 0, %s8, %s6
  $region1: #{tpu_custom_call.1} parent=0
    #allocation2 [shape = 'u8[131072]{0}', space=vmem, size = 0x20000, scoped, tag = 'input window, operand 0']
    #allocation3 [shape = 's32[2]{0}', space=sflag, size = 0x8, scoped, tag = 'scoped memory for tpu_custom_call.1']
    #allocation4 [shape = 's32[2]{0}', space=sflag, size = 0x8, scoped, tag = 'scoped memory for tpu_custom_call.1']
    #allocation5 [shape = 'u8[32768]{0}', space=vmem, size = 0x8000, scoped, tag = 'input window, operand 1, single buffered']
    #allocation6 [shape = 's32[1]{0}', space=sflag, size = 0x4, scoped, tag = 'scoped memory for tpu_custom_call.1']
    #allocation7 [shape = 'u8[16384]{0}', space=vmem, size = 0x4000, scoped, tag = 'input window, operand 3, single buffered']
    #allocation8 [shape = 'u8[131072]{0}', space=vmem, size = 0x20000, scoped, tag = 'output window, operand 0']
    %10 = vsyncpa [#allocation3], 0
    %s11 = scalar_lea.sflag [#allocation3], 1
    %12 = vsyncpa %s11, 0
    %13 = vsyncpa [#allocation6], 0
    %14 = vsyncpa [#allocation4], 0
    %s15 = scalar_lea.sflag [#allocation4], 1
    %16 = vsyncpa %s15, 0
    loop: start=0, step=1, limit=4
    $region2: #{tpu_custom_call.1} parent=1 // loop_pre_header
      _
    $region3: #{tpu_custom_call.1} parent=1 // loop_header
      %s18 = sphi 0, %s22
      %p19 = scmp.ge.s32.totalorder %s18, 4
      %s28 = sphi 0, %s30
      %s31 = sphi 0, %s28
      %s32 = sphi 0, %s31
      %s48 = sphi 0, %s32
      %s52 = sphi 0, %s52
      %s54 = sphi 0, %s52
      %s55 = sphi 0, %s54
      %s69 = sphi 0, %s55
      %s73 = sphi 0, %s73
      %s75 = sphi 0, %s73
      %s76 = sphi 0, %s75
      %s90 = sphi 0, %s76
      %s94 = sphi 0, %s94
      %s96 = sphi 0, %s94
      %s97 = sphi 0, %s96
      %s111 = sphi 0, %s97
      %s115 = sphi 0, %s115
      %s117 = sphi 0, %s115
      %s118 = sphi 0, %s117
      %s132 = sphi 0, %s118
      %s138 = sphi 0, %s140
      %s141 = sphi 0, %s138
      %s142 = sphi 0, %s141
      %s158 = sphi 0, %s142
    $region4: #{tpu_custom_call.1} parent=1 // loop_header_branch
      %21 = sbr.rel (%p19) target = $region8
    $region5: #{tpu_custom_call.1} parent=1 // loop_body
      %s23 = ssub.s32 %s18, 1
      %s24 = ssub.s32 %s18, 2
      %s25 = sadd.s32 %s18, 1
      %s26 = ssub.s32 %s18, %s25
      %p27 = scmp.eq.s32.totalorder %s26, 0
      %s29 = sadd.s32 %s28, 1
      %s30 = scalar_select %p27, %s28, %s29
      %p33 = pneg %p27
      %p34 = scmp.eq.s32.totalorder %s18, 1
      %p35 = por %p33, %p34
      %p36 = scmp.ne.s32.totalorder %s28, %s31
      %p37 = scmp.eq.s32.totalorder %s18, 0
      %p38 = por %p36, %p37
      %p39 = scmp.ne.s32.totalorder %s28, %s31
      %p40 = scmp.eq.s32.totalorder %s23, 1
      %p41 = por %p39, %p40
      %p42 = scmp.ne.s32.totalorder %s31, %s32
      %p43 = scmp.eq.s32.totalorder %s23, 0
      %p44 = por %p42, %p43
      %p45 = scmp.ne.s32.totalorder %s31, %s32
      %p46 = scmp.eq.s32.totalorder %s24, 1
      %p47 = por %p45, %p46
      %p49 = scmp.ne.s32.totalorder %s32, %s48
      %p50 = scmp.eq.s32.totalorder %s24, 0
      %p51 = por %p49, %p50
      %s53 = sadd.s32 %s52, 1
      %p56 = scmp.eq.s32.totalorder %s18, 1
      %p57 = scmp.ne.s32.totalorder %s52, %s54
      %p58 = scmp.eq.s32.totalorder %s18, 0
      %p59 = por %p57, %p58
      %p60 = scmp.ne.s32.totalorder %s52, %s54
      %p61 = scmp.eq.s32.totalorder %s23, 1
      %p62 = por %p60, %p61
      %p63 = scmp.ne.s32.totalorder %s54, %s55
      %p64 = scmp.eq.s32.totalorder %s23, 0
      %p65 = por %p63, %p64
      %p66 = scmp.ne.s32.totalorder %s54, %s55
      %p67 = scmp.eq.s32.totalorder %s24, 1
      %p68 = por %p66, %p67
      %p70 = scmp.ne.s32.totalorder %s55, %s69
      %p71 = scmp.eq.s32.totalorder %s24, 0
      %p72 = por %p70, %p71
      %s74 = sadd.s32 %s73, 1
      %p77 = scmp.eq.s32.totalorder %s18, 1
      %p78 = scmp.ne.s32.totalorder %s73, %s75
      %p79 = scmp.eq.s32.totalorder %s18, 0
      %p80 = por %p78, %p79
      %p81 = scmp.ne.s32.totalorder %s73, %s75
      %p82 = scmp.eq.s32.totalorder %s23, 1
      %p83 = por %p81, %p82
      %p84 = scmp.ne.s32.totalorder %s75, %s76
      %p85 = scmp.eq.s32.totalorder %s23, 0
      %p86 = por %p84, %p85
      %p87 = scmp.ne.s32.totalorder %s75, %s76
      %p88 = scmp.eq.s32.totalorder %s24, 1
      %p89 = por %p87, %p88
      %p91 = scmp.ne.s32.totalorder %s76, %s90
      %p92 = scmp.eq.s32.totalorder %s24, 0
      %p93 = por %p91, %p92
      %s95 = sadd.s32 %s94, 1
      %p98 = scmp.eq.s32.totalorder %s18, 1
      %p99 = scmp.ne.s32.totalorder %s94, %s96
      %p100 = scmp.eq.s32.totalorder %s18, 0
      %p101 = por %p99, %p100
      %p102 = scmp.ne.s32.totalorder %s94, %s96
      %p103 = scmp.eq.s32.totalorder %s23, 1
      %p104 = por %p102, %p103
      %p105 = scmp.ne.s32.totalorder %s96, %s97
      %p106 = scmp.eq.s32.totalorder %s23, 0
      %p107 = por %p105, %p106
      %p108 = scmp.ne.s32.totalorder %s96, %s97
      %p109 = scmp.eq.s32.totalorder %s24, 1
      %p110 = por %p108, %p109
      %p112 = scmp.ne.s32.totalorder %s97, %s111
      %p113 = scmp.eq.s32.totalorder %s24, 0
      %p114 = por %p112, %p113
      %s116 = sadd.s32 %s115, 1
      %p119 = scmp.eq.s32.totalorder %s18, 1
      %p120 = scmp.ne.s32.totalorder %s115, %s117
      %p121 = scmp.eq.s32.totalorder %s18, 0
      %p122 = por %p120, %p121
      %p123 = scmp.ne.s32.totalorder %s115, %s117
      %p124 = scmp.eq.s32.totalorder %s23, 1
      %p125 = por %p123, %p124
      %p126 = scmp.ne.s32.totalorder %s117, %s118
      %p127 = scmp.eq.s32.totalorder %s23, 0
      %p128 = por %p126, %p127
      %p129 = scmp.ne.s32.totalorder %s117, %s118
      %p130 = scmp.eq.s32.totalorder %s24, 1
      %p131 = por %p129, %p130
      %p133 = scmp.ne.s32.totalorder %s118, %s132
      %p134 = scmp.eq.s32.totalorder %s24, 0
      %p135 = por %p133, %p134
      %s136 = ssub.s32 %s18, %s25
      %p137 = scmp.eq.s32.totalorder %s136, 0
      %s139 = sadd.s32 %s138, 1
      %s140 = scalar_select %p137, %s138, %s139
      %p143 = pneg %p137
      %p144 = scmp.eq.s32.totalorder %s18, 1
      %p145 = por %p143, %p144
      %p146 = scmp.ne.s32.totalorder %s138, %s141
      %p147 = scmp.eq.s32.totalorder %s18, 0
      %p148 = por %p146, %p147
      %p149 = scmp.ne.s32.totalorder %s138, %s141
      %p150 = scmp.eq.s32.totalorder %s23, 1
      %p151 = por %p149, %p150
      %p152 = scmp.ne.s32.totalorder %s141, %s142
      %p153 = scmp.eq.s32.totalorder %s23, 0
      %p154 = por %p152, %p153
      %p155 = scmp.ne.s32.totalorder %s141, %s142
      %p156 = scmp.eq.s32.totalorder %s24, 1
      %p157 = por %p155, %p156
      %p159 = scmp.ne.s32.totalorder %s142, %s158
      %p160 = scmp.eq.s32.totalorder %s24, 0
      %p161 = por %p159, %p160
      %p162 = scmp.le.s32.totalorder 1, %s18
      %p163 = scmp.lt.s32.totalorder %s18, 3
      %p164 = pnand %p162, %p163
      %p165 = pneg %p164
      // Predicated region
      $region9: #{tpu_custom_call.1} parent=5 // pred_check
        _
      $region10: #{tpu_custom_call.1} parent=5 // pred_check_branch
        %167 = sbr.rel (%p164) target = $region12
      $region11: #{tpu_custom_call.1} parent=5 // pred_region
        %s168 = ssub.s32 %s18, 1
        // Predicated region
        $region13: #{tpu_custom_call.1} parent=11 // pred_check
          %p169 = pneg %p65
        $region14: #{tpu_custom_call.1} parent=11 // pred_check_branch
          %171 = sbr.rel (%p169) target = $region16
        $region15: #{tpu_custom_call.1} parent=11 // pred_region
          %s173 = ssub.s32 1024, 1024
          %174 = vsyncadd [#allocation6], %s173
          %s175 = sshll.u32 [#allocation5], 4
          %s176 = int_to_ptr.vmem [resolvable:$true] %s175
          %181 = dma.hbm_to_vmem [thread:$0]  %s1, 1024, %s176, [#allocation6], 128, 128, 8
        $region16: #{tpu_custom_call.1} parent=11 // pred_fallthru
          _
        // Predicated region
        $region17: #{tpu_custom_call.1} parent=11 // pred_check
          %p182 = pneg %p86
        $region18: #{tpu_custom_call.1} parent=11 // pred_check_branch
          %184 = sbr.rel (%p182) target = $region20
        $region19: #{tpu_custom_call.1} parent=11 // pred_region
          _
        $region20: #{tpu_custom_call.1} parent=11 // pred_fallthru
          _
        // Predicated region
        $region21: #{tpu_custom_call.1} parent=11 // pred_check
          %p185 = pneg %p107
        $region22: #{tpu_custom_call.1} parent=11 // pred_check_branch
          %187 = sbr.rel (%p185) target = $region24
        $region23: #{tpu_custom_call.1} parent=11 // pred_region
          %s189 = ssub.s32 512, 512
          %190 = vsyncadd [#allocation6], %s189
          %s191 = sshll.u32 [#allocation7], 4
          %s192 = int_to_ptr.vmem [resolvable:$true] %s191
          %197 = dma.hbm_to_vmem [thread:$0]  %s3, 512, %s192, [#allocation6], 64, 64, 4
        $region24: #{tpu_custom_call.1} parent=11 // pred_fallthru
          _
        // Predicated region
        $region25: #{tpu_custom_call.1} parent=11 // pred_check
          %p198 = pneg %p128
        $region26: #{tpu_custom_call.1} parent=11 // pred_check_branch
          %200 = sbr.rel (%p198) target = $region28
        $region27: #{tpu_custom_call.1} parent=11 // pred_region
          _
        $region28: #{tpu_custom_call.1} parent=11 // pred_fallthru
          _
      $region12: #{tpu_custom_call.1} parent=5 // pred_fallthru
        _
      %p201 = scmp.lt.s32.totalorder %s18, 2
      // Predicated region
      $region29: #{tpu_custom_call.1} parent=5 // pred_check
        %p202 = pneg %p201
      $region30: #{tpu_custom_call.1} parent=5 // pred_check_branch
        %204 = sbr.rel (%p202) target = $region32
      $region31: #{tpu_custom_call.1} parent=5 // pred_region
        // Predicated region
        $region33: #{tpu_custom_call.1} parent=31 // pred_check
          %p205 = pneg %p38
        $region34: #{tpu_custom_call.1} parent=31 // pred_check_branch
          %207 = sbr.rel (%p205) target = $region36
        $region35: #{tpu_custom_call.1} parent=31 // pred_region
          %s208 = sand.u32 %s28, 1
          %s209 = scalar_lea.sflag [#allocation3], %s208
          %s210 = sand.u32 %s28, 1
          %s211 = smul.addr %s210, 128
          %s212 = scalar_lea.vmem [#allocation2], %s211
          %s214 = ssub.s32 2048, 2048
          %215 = vsyncadd %s209, %s214
          %s216 = smul.addr %s18, 16
          %s217 = smul.addr %s216, 128
          %s218 = scalar_lea.hbm %s0, %s217
          %s219 = sshll.u32 %s212, 4
          %s220 = int_to_ptr.vmem [resolvable:$true] %s219
          %225 = dma.hbm_to_vmem [thread:$0]  %s218, 2048, %s220, %s209, 256, 256, 16
        $region36: #{tpu_custom_call.1} parent=31 // pred_fallthru
          _
      $region32: #{tpu_custom_call.1} parent=5 // pred_fallthru
        _
      %p226 = scmp.le.s32.totalorder 1, %s18
      %p227 = scmp.lt.s32.totalorder %s18, 3
      %p228 = pnand %p226, %p227
      %p229 = pneg %p228
      // Predicated region
      $region37: #{tpu_custom_call.1} parent=5 // pred_check
        _
      $region38: #{tpu_custom_call.1} parent=5 // pred_check_branch
        %231 = sbr.rel (%p228) target = $region40
      $region39: #{tpu_custom_call.1} parent=5 // pred_region
        %s232 = ssub.s32 %s18, 1
        %s233 = sand.u32 %s31, 1
        %s234 = scalar_lea.sflag [#allocation3], %s233
        %s235 = sand.u32 %s31, 1
        %s236 = smul.addr %s235, 128
        %s237 = scalar_lea.vmem [#allocation2], %s236
        // Predicated region
        $region41: #{tpu_custom_call.1} parent=39 // pred_check
          %p238 = pneg %p44
        $region42: #{tpu_custom_call.1} parent=39 // pred_check_branch
          %240 = sbr.rel (%p238) target = $region44
        $region43: #{tpu_custom_call.1} parent=39 // pred_region
          %241 = dma.done %s234, 2048
        $region44: #{tpu_custom_call.1} parent=39 // pred_fallthru
          _
        // Predicated region
        $region45: #{tpu_custom_call.1} parent=39 // pred_check
          %p242 = pneg %p65
        $region46: #{tpu_custom_call.1} parent=39 // pred_check_branch
          %244 = sbr.rel (%p242) target = $region48
        $region47: #{tpu_custom_call.1} parent=39 // pred_region
          %245 = dma.done [#allocation6], 1024
        $region48: #{tpu_custom_call.1} parent=39 // pred_fallthru
          _
        // Predicated region
        $region49: #{tpu_custom_call.1} parent=39 // pred_check
          %p246 = pneg %p107
        $region50: #{tpu_custom_call.1} parent=39 // pred_check_branch
          %248 = sbr.rel (%p246) target = $region52
        $region51: #{tpu_custom_call.1} parent=39 // pred_region
          %249 = dma.done [#allocation6], 512
        $region52: #{tpu_custom_call.1} parent=39 // pred_fallthru
          _
        %s250 = sand.u32 %s31, 1
        %s251 = scalar_lea.sflag [#allocation3], %s250
        %s252 = sand.u32 %s31, 1
        %s253 = smul.addr %s252, 128
        %s254 = scalar_lea.vmem [#allocation2], %s253
        %p255 = pneg %p44
        %p256 = pneg %p41
        %p257 = pneg %p65
        %p258 = pneg %p62
        %p259 = pneg %p86
        %p260 = pneg %p83
        %p261 = pneg %p107
        %p262 = pneg %p104
        %p263 = pneg %p128
        %p264 = pneg %p125
        %p265 = pneg %p154
        %p266 = pneg %p151
        %s267 = sand.u32 %s141, 1
        %s268 = scalar_lea.sflag [#allocation4], %s267
        %s269 = sand.u32 %s141, 1
        %s270 = smul.addr %s269, 128
        %s271 = scalar_lea.vmem [#allocation8], %s270
        %v273 = vld [vmem:[%s237] sm:$0xff]
        %v274 = vld [vmem:[%s237 + $0x8] sm:$0xff]
        %v275 = vld [vmem:[%s237 + $0x10] sm:$0xff]
        %v276 = vld [vmem:[%s237 + $0x18] sm:$0xff]
        %v277 = vld [vmem:[%s237 + $0x20] sm:$0xff]
        %v278 = vld [vmem:[%s237 + $0x28] sm:$0xff]
        %v279 = vld [vmem:[%s237 + $0x30] sm:$0xff]
        %v280 = vld [vmem:[%s237 + $0x38] sm:$0xff]
        %v281 = vld [vmem:[%s237 + $0x40] sm:$0xff]
        %v282 = vld [vmem:[%s237 + $0x48] sm:$0xff]
        %v283 = vld [vmem:[%s237 + $0x50] sm:$0xff]
        %v284 = vld [vmem:[%s237 + $0x58] sm:$0xff]
        %v285 = vld [vmem:[%s237 + $0x60] sm:$0xff]
        %v286 = vld [vmem:[%s237 + $0x68] sm:$0xff]
        %v287 = vld [vmem:[%s237 + $0x70] sm:$0xff]
        %v288 = vld [vmem:[%s237 + $0x78] sm:$0xff]
        %289 = vxpose.xlu0.b32.start [1/16] %v273, 128
        %290 = vxpose.xlu0.b32.cont [2/16] %v275, 128
        %291 = vxpose.xlu0.b32.cont [3/16] %v277, 128
        %292 = vxpose.xlu0.b32.cont [4/16] %v279, 128
        %293 = vxpose.xlu0.b32.cont [5/16] %v281, 128
        %294 = vxpose.xlu0.b32.cont [6/16] %v283, 128
        %295 = vxpose.xlu0.b32.cont [7/16] %v285, 128
        %296 = vxpose.xlu0.b32.cont [8/16] %v287, 128
        %297 = vxpose.xlu0.b32.cont [9/16] 0.0, 128
        %298 = vxpose.xlu0.b32.cont [10/16] 0.0, 128
        %299 = vxpose.xlu0.b32.cont [11/16] 0.0, 128
        %300 = vxpose.xlu0.b32.cont [12/16] 0.0, 128
        %301 = vxpose.xlu0.b32.cont [13/16] 0.0, 128
        %302 = vxpose.xlu0.b32.cont [14/16] 0.0, 128
        %303 = vxpose.xlu0.b32.cont [15/16] 0.0, 128
        %304 = vxpose.xlu0.b32.end [16/16] 0.0, 128
        %v305 = vpop.trf.xlu0
        %v306 = vpop.trf.xlu0
        %v307 = vpop.trf.xlu0
        %v308 = vpop.trf.xlu0
        %v309 = vpop.trf.xlu0
        %v310 = vpop.trf.xlu0
        %v311 = vpop.trf.xlu0
        %v312 = vpop.trf.xlu0
        %v313 = vpop.trf.xlu0
        %v314 = vpop.trf.xlu0
        %v315 = vpop.trf.xlu0
        %v316 = vpop.trf.xlu0
        %v317 = vpop.trf.xlu0
        %v318 = vpop.trf.xlu0
        %v319 = vpop.trf.xlu0
        %v320 = vpop.trf.xlu0
        %321 = vxpose.xlu0.b32.start [1/16] %v274, 128
        %322 = vxpose.xlu0.b32.cont [2/16] %v276, 128
        %323 = vxpose.xlu0.b32.cont [3/16] %v278, 128
        %324 = vxpose.xlu0.b32.cont [4/16] %v280, 128
        %325 = vxpose.xlu0.b32.cont [5/16] %v282, 128
        %326 = vxpose.xlu0.b32.cont [6/16] %v284, 128
        %327 = vxpose.xlu0.b32.cont [7/16] %v286, 128
        %328 = vxpose.xlu0.b32.cont [8/16] %v288, 128
        %329 = vxpose.xlu0.b32.cont [9/16] 0.0, 128
        %330 = vxpose.xlu0.b32.cont [10/16] 0.0, 128
        %331 = vxpose.xlu0.b32.cont [11/16] 0.0, 128
        %332 = vxpose.xlu0.b32.cont [12/16] 0.0, 128
        %333 = vxpose.xlu0.b32.cont [13/16] 0.0, 128
        %334 = vxpose.xlu0.b32.cont [14/16] 0.0, 128
        %335 = vxpose.xlu0.b32.cont [15/16] 0.0, 128
        %336 = vxpose.xlu0.b32.end [16/16] 0.0, 128
        %v337 = vpop.trf.xlu0
        %v338 = vpop.trf.xlu0
        %v339 = vpop.trf.xlu0
        %v340 = vpop.trf.xlu0
        %v341 = vpop.trf.xlu0
        %v342 = vpop.trf.xlu0
        %v343 = vpop.trf.xlu0
        %v344 = vpop.trf.xlu0
        %v345 = vpop.trf.xlu0
        %v346 = vpop.trf.xlu0
        %v347 = vpop.trf.xlu0
        %v348 = vpop.trf.xlu0
        %v349 = vpop.trf.xlu0
        %v350 = vpop.trf.xlu0
        %v351 = vpop.trf.xlu0
        %v352 = vpop.trf.xlu0
        %v353 = vpack.c.bf16 %v306, %v305
        %v354 = vpack.c.bf16 %v308, %v307
        %v355 = vpack.c.bf16 %v310, %v309
        %v356 = vpack.c.bf16 %v312, %v311
        %v357 = vpack.c.bf16 %v314, %v313
        %v358 = vpack.c.bf16 %v316, %v315
        %v359 = vpack.c.bf16 %v318, %v317
        %v360 = vpack.c.bf16 %v320, %v319
        %v361 = vpack.c.bf16 %v338, %v337
        %v362 = vpack.c.bf16 %v340, %v339
        %v363 = vpack.c.bf16 %v342, %v341
        %v364 = vpack.c.bf16 %v344, %v343
        %v365 = vpack.c.bf16 %v346, %v345
        %v366 = vpack.c.bf16 %v348, %v347
        %v367 = vpack.c.bf16 %v350, %v349
        %v368 = vpack.c.bf16 %v352, %v351
        %v369 = vld [vmem:[#allocation5] sm:$0xff]
        %v370 = vld [vmem:[#allocation5 + $0x8] sm:$0xff]
        %v371 = vld [vmem:[#allocation5 + $0x10] sm:$0xff]
        %v372 = vld [vmem:[#allocation5 + $0x18] sm:$0xff]
        %v373 = vld [vmem:[#allocation5 + $0x20] sm:$0xff]
        %v374 = vld [vmem:[#allocation5 + $0x28] sm:$0xff]
        %v375 = vld [vmem:[#allocation5 + $0x30] sm:$0xff]
        %v376 = vld [vmem:[#allocation5 + $0x38] sm:$0xff]
        %v377 = vld [vmem:[%s2] sm:$0x3]
        %v379 = vlaneseq
        %v380 = vshrl.u32 %v379, 7
        %v381 = vsub.s32 0, %v380
        %v382 = vrot.slane %v377, %v381
        %v383 = vlaneseq
        %v384 = vshrl.u32 %v383, 7
        %v385 = vsub.s32 1, %v384
        %v386 = vrot.slane %v377, %v385
        %v397 = vunpack.c.l.b16 %v369
        %v398 = vunpack.c.h.b16 %v369
        %v399 = vunpack.c.l.b16 %v370
        %v400 = vunpack.c.h.b16 %v370
        %v401 = vunpack.c.l.b16 %v371
        %v402 = vunpack.c.h.b16 %v371
        %v403 = vunpack.c.l.b16 %v372
        %v404 = vunpack.c.h.b16 %v372
        %v405 = vunpack.c.l.b16 %v373
        %v406 = vunpack.c.h.b16 %v373
        %v407 = vunpack.c.l.b16 %v374
        %v408 = vunpack.c.h.b16 %v374
        %v409 = vunpack.c.l.b16 %v375
        %v410 = vunpack.c.h.b16 %v375
        %v411 = vunpack.c.l.b16 %v376
        %v412 = vunpack.c.h.b16 %v376
        %v413 = vpack.c.b16 %v399, %v397
        %v414 = vpack.c.b16 %v400, %v398
        %v415 = vpack.c.b16 %v403, %v401
        %v416 = vpack.c.b16 %v404, %v402
        %v417 = vpack.c.b16 %v407, %v405
        %v418 = vpack.c.b16 %v408, %v406
        %v419 = vpack.c.b16 %v411, %v409
        %v420 = vpack.c.b16 %v412, %v410
        %vm429 = vcmask 523264
        %v431 = vsel %vm429, %v353, 0
        %v434 = vsel %vm429, %v354, 0
        %v437 = vsel %vm429, %v355, 0
        %v440 = vsel %vm429, %v356, 0
        %v443 = vsel %vm429, %v357, 0
        %v446 = vsel %vm429, %v358, 0
        %v449 = vsel %vm429, %v359, 0
        %v452 = vsel %vm429, %v360, 0
        %v455 = vsel %vm429, %v361, 0
        %v458 = vsel %vm429, %v362, 0
        %v461 = vsel %vm429, %v363, 0
        %v464 = vsel %vm429, %v364, 0
        %v467 = vsel %vm429, %v365, 0
        %v470 = vsel %vm429, %v366, 0
        %v473 = vsel %vm429, %v367, 0
        %v476 = vsel %vm429, %v368, 0
        %478 = vmatprep.subr.bf16.mxu0 %v414
        %479 = vmatpush1.bf16.msra.mxu0 %v413
        %480 = vmatprep.subr.bf16.mxu0 %v416
        %481 = vmatpush1.bf16.msra.mxu0 %v415
        %482 = vmatprep.subr.bf16.mxu0 %v418
        %483 = vmatpush1.bf16.msra.mxu0 %v417
        %484 = vmatprep.subr.bf16.mxu0 %v420
        %485 = vmatpush1.bf16.msra.mxu0 %v419
        %486 = vmatprep.subr.bf16.mxu0 0
        %487 = vmatpush1.bf16.msra.mxu0 0
        %488 = vmatprep.subr.bf16.mxu0 0
        %489 = vmatpush1.bf16.msra.mxu0 0
        %490 = vmatprep.subr.bf16.mxu0 0
        %491 = vmatpush1.bf16.msra.mxu0 0
        %492 = vmatprep.subr.bf16.mxu0 0
        %493 = vmatpush1.bf16.msra.mxu0 0
        %494 = vmatprep.subr.bf16.mxu0 0
        %495 = vmatpush1.bf16.msra.mxu0 0
        %496 = vmatprep.subr.bf16.mxu0 0
        %497 = vmatpush1.bf16.msra.mxu0 0
        %498 = vmatprep.subr.bf16.mxu0 0
        %499 = vmatpush1.bf16.msra.mxu0 0
        %500 = vmatprep.subr.bf16.mxu0 0
        %501 = vmatpush1.bf16.msra.mxu0 0
        %502 = vmatprep.subr.bf16.mxu0 0
        %503 = vmatpush1.bf16.msra.mxu0 0
        %504 = vmatprep.subr.bf16.mxu0 0
        %505 = vmatpush1.bf16.msra.mxu0 0
        %506 = vmatprep.subr.bf16.mxu0 0
        %507 = vmatpush1.bf16.msra.mxu0 0
        %508 = vmatprep.subr.bf16.mxu0 0
        %509 = vmatpush1.bf16.msra.mxu0 0
        %510 = vmatprep.mubr.bf16.mxu0 0
        %511 = vmatmul.mubr.bf16.gmra.mrb[0].mxu0 %v431
        %v512 = vpop.f32.mrb[0].mxu0
        %v513 = vadd.f32 %v382, %v512
        %v514 = vpop.f32.mrb[0].mxu0
        %v515 = vadd.f32 %v386, %v514
        %v516 = vpop.f32.mrb[0].mxu0
        %v517 = vadd.f32 %v382, %v516
        %v518 = vpop.f32.mrb[0].mxu0
        %v519 = vadd.f32 %v386, %v518
        %520 = vmatprep.mubr.bf16.mxu0 0
        %521 = vmatmul.mubr.bf16.gmra.mrb[0].mxu0 %v434
        %v522 = vpop.f32.mrb[0].mxu0
        %v523 = vadd.f32 %v382, %v522
        %v524 = vpop.f32.mrb[0].mxu0
        %v525 = vadd.f32 %v386, %v524
        %v526 = vpop.f32.mrb[0].mxu0
        %v527 = vadd.f32 %v382, %v526
        %v528 = vpop.f32.mrb[0].mxu0
        %v529 = vadd.f32 %v386, %v528
        %530 = vmatprep.mubr.bf16.mxu0 0
        %531 = vmatmul.mubr.bf16.gmra.mrb[0].mxu0 %v437
        %v532 = vpop.f32.mrb[0].mxu0
        %v533 = vadd.f32 %v382, %v532
        %v534 = vpop.f32.mrb[0].mxu0
        %v535 = vadd.f32 %v386, %v534
        %v536 = vpop.f32.mrb[0].mxu0
        %v537 = vadd.f32 %v382, %v536
        %v538 = vpop.f32.mrb[0].mxu0
        %v539 = vadd.f32 %v386, %v538
        %540 = vmatprep.mubr.bf16.mxu0 0
        %541 = vmatmul.mubr.bf16.gmra.mrb[0].mxu0 %v440
        %v542 = vpop.f32.mrb[0].mxu0
        %v543 = vadd.f32 %v382, %v542
        %v544 = vpop.f32.mrb[0].mxu0
        %v545 = vadd.f32 %v386, %v544
        %v546 = vpop.f32.mrb[0].mxu0
        %v547 = vadd.f32 %v382, %v546
        %v548 = vpop.f32.mrb[0].mxu0
        %v549 = vadd.f32 %v386, %v548
        %550 = vmatprep.mubr.bf16.mxu0 0
        %551 = vmatmul.mubr.bf16.gmra.mrb[0].mxu0 %v443
        %v552 = vpop.f32.mrb[0].mxu0
        %v553 = vadd.f32 %v382, %v552
        %v554 = vpop.f32.mrb[0].mxu0
        %v555 = vadd.f32 %v386, %v554
        %v556 = vpop.f32.mrb[0].mxu0
        %v557 = vadd.f32 %v382, %v556
        %v558 = vpop.f32.mrb[0].mxu0
        %v559 = vadd.f32 %v386, %v558
        %560 = vmatprep.mubr.bf16.mxu0 0
        %561 = vmatmul.mubr.bf16.gmra.mrb[0].mxu0 %v446
        %v562 = vpop.f32.mrb[0].mxu0
        %v563 = vadd.f32 %v382, %v562
        %v564 = vpop.f32.mrb[0].mxu0
        %v565 = vadd.f32 %v386, %v564
        %v566 = vpop.f32.mrb[0].mxu0
        %v567 = vadd.f32 %v382, %v566
        %v568 = vpop.f32.mrb[0].mxu0
        %v569 = vadd.f32 %v386, %v568
        %570 = vmatprep.mubr.bf16.mxu0 0
        %571 = vmatmul.mubr.bf16.gmra.mrb[0].mxu0 %v449
        %v572 = vpop.f32.mrb[0].mxu0
        %v573 = vadd.f32 %v382, %v572
        %v574 = vpop.f32.mrb[0].mxu0
        %v575 = vadd.f32 %v386, %v574
        %v576 = vpop.f32.mrb[0].mxu0
        %v577 = vadd.f32 %v382, %v576
        %v578 = vpop.f32.mrb[0].mxu0
        %v579 = vadd.f32 %v386, %v578
        %580 = vmatprep.mubr.bf16.mxu0 0
        %581 = vmatmul.mubr.bf16.gmra.mrb[0].mxu0 %v452
        %v582 = vpop.f32.mrb[0].mxu0
        %v583 = vadd.f32 %v382, %v582
        %v584 = vpop.f32.mrb[0].mxu0
        %v585 = vadd.f32 %v386, %v584
        %v586 = vpop.f32.mrb[0].mxu0
        %v587 = vadd.f32 %v382, %v586
        %v588 = vpop.f32.mrb[0].mxu0
        %v589 = vadd.f32 %v386, %v588
        %590 = vmatprep.mubr.bf16.mxu0 0
        %591 = vmatmul.mubr.bf16.gmra.mrb[0].mxu0 %v455
        %v592 = vpop.f32.mrb[0].mxu0
        %v593 = vadd.f32 %v382, %v592
        %v594 = vpop.f32.mrb[0].mxu0
        %v595 = vadd.f32 %v386, %v594
        %v596 = vpop.f32.mrb[0].mxu0
        %v597 = vadd.f32 %v382, %v596
        %v598 = vpop.f32.mrb[0].mxu0
        %v599 = vadd.f32 %v386, %v598
        %600 = vmatprep.mubr.bf16.mxu0 0
        %601 = vmatmul.mubr.bf16.gmra.mrb[0].mxu0 %v458
        %v602 = vpop.f32.mrb[0].mxu0
        %v603 = vadd.f32 %v382, %v602
        %v604 = vpop.f32.mrb[0].mxu0
        %v605 = vadd.f32 %v386, %v604
        %v606 = vpop.f32.mrb[0].mxu0
        %v607 = vadd.f32 %v382, %v606
        %v608 = vpop.f32.mrb[0].mxu0
        %v609 = vadd.f32 %v386, %v608
        %610 = vmatprep.mubr.bf16.mxu0 0
        %611 = vmatmul.mubr.bf16.gmra.mrb[0].mxu0 %v461
        %v612 = vpop.f32.mrb[0].mxu0
        %v613 = vadd.f32 %v382, %v612
        %v614 = vpop.f32.mrb[0].mxu0
        %v615 = vadd.f32 %v386, %v614
        %v616 = vpop.f32.mrb[0].mxu0
        %v617 = vadd.f32 %v382, %v616
        %v618 = vpop.f32.mrb[0].mxu0
        %v619 = vadd.f32 %v386, %v618
        %620 = vmatprep.mubr.bf16.mxu0 0
        %621 = vmatmul.mubr.bf16.gmra.mrb[0].mxu0 %v464
        %v622 = vpop.f32.mrb[0].mxu0
        %v623 = vadd.f32 %v382, %v622
        %v624 = vpop.f32.mrb[0].mxu0
        %v625 = vadd.f32 %v386, %v624
        %v626 = vpop.f32.mrb[0].mxu0
        %v627 = vadd.f32 %v382, %v626
        %v628 = vpop.f32.mrb[0].mxu0
        %v629 = vadd.f32 %v386, %v628
        %630 = vmatprep.mubr.bf16.mxu0 0
        %631 = vmatmul.mubr.bf16.gmra.mrb[0].mxu0 %v467
        %v632 = vpop.f32.mrb[0].mxu0
        %v633 = vadd.f32 %v382, %v632
        %v634 = vpop.f32.mrb[0].mxu0
        %v635 = vadd.f32 %v386, %v634
        %v636 = vpop.f32.mrb[0].mxu0
        %v637 = vadd.f32 %v382, %v636
        %v638 = vpop.f32.mrb[0].mxu0
        %v639 = vadd.f32 %v386, %v638
        %640 = vmatprep.mubr.bf16.mxu0 0
        %641 = vmatmul.mubr.bf16.gmra.mrb[0].mxu0 %v470
        %v642 = vpop.f32.mrb[0].mxu0
        %v643 = vadd.f32 %v382, %v642
        %v644 = vpop.f32.mrb[0].mxu0
        %v645 = vadd.f32 %v386, %v644
        %v646 = vpop.f32.mrb[0].mxu0
        %v647 = vadd.f32 %v382, %v646
        %v648 = vpop.f32.mrb[0].mxu0
        %v649 = vadd.f32 %v386, %v648
        %650 = vmatprep.mubr.bf16.mxu0 0
        %651 = vmatmul.mubr.bf16.gmra.mrb[0].mxu0 %v473
        %v652 = vpop.f32.mrb[0].mxu0
        %v653 = vadd.f32 %v382, %v652
        %v654 = vpop.f32.mrb[0].mxu0
        %v655 = vadd.f32 %v386, %v654
        %v656 = vpop.f32.mrb[0].mxu0
        %v657 = vadd.f32 %v382, %v656
        %v658 = vpop.f32.mrb[0].mxu0
        %v659 = vadd.f32 %v386, %v658
        %660 = vmatprep.mubr.bf16.mxu0 0
        %661 = vmatmul.mubr.bf16.gmra.mrb[0].mxu0 %v476
        %v662 = vpop.f32.mrb[0].mxu0
        %v663 = vadd.f32 %v382, %v662
        %v664 = vpop.f32.mrb[0].mxu0
        %v665 = vadd.f32 %v386, %v664
        %v666 = vpop.f32.mrb[0].mxu0
        %v667 = vadd.f32 %v382, %v666
        %v668 = vpop.f32.mrb[0].mxu0
        %v669 = vadd.f32 %v386, %v668
        %670 = vdwg.mxu0
        %v671 = vld [vmem:[#allocation7] sm:$0xf]
        %v672 = vld [vmem:[#allocation7 + $0x4] sm:$0xf]
        %v673 = vld [vmem:[#allocation7 + $0x8] sm:$0xf]
        %v674 = vld [vmem:[#allocation7 + $0xc] sm:$0xf]
        %v675 = vld [vmem:[#allocation7 + $0x10] sm:$0xf]
        %v676 = vld [vmem:[#allocation7 + $0x14] sm:$0xf]
        %v677 = vld [vmem:[#allocation7 + $0x18] sm:$0xf]
        %v678 = vld [vmem:[#allocation7 + $0x1c] sm:$0xf]
        %v679 = vld [vmem:[%s4] sm:$0x1]
        %v681 = vlaneseq
        %v682 = vshrl.u32 %v681, 7
        %v683 = vsub.s32 0, %v682
        %v684 = vrot.slane %v679, %v683
        %v686 = vadd.f32 %v305, %v684
        %v687 = vadd.f32 %v306, %v684
        %v688 = vadd.f32 %v307, %v684
        %v689 = vadd.f32 %v308, %v684
        %v690 = vadd.f32 %v309, %v684
        %v691 = vadd.f32 %v310, %v684
        %v692 = vadd.f32 %v311, %v684
        %v693 = vadd.f32 %v312, %v684
        %v694 = vadd.f32 %v313, %v684
        %v695 = vadd.f32 %v314, %v684
        %v696 = vadd.f32 %v315, %v684
        %v697 = vadd.f32 %v316, %v684
        %v698 = vadd.f32 %v317, %v684
        %v699 = vadd.f32 %v318, %v684
        %v700 = vadd.f32 %v319, %v684
        %v701 = vadd.f32 %v320, %v684
        %v702 = vadd.f32 %v337, %v684
        %v703 = vadd.f32 %v338, %v684
        %v704 = vadd.f32 %v339, %v684
        %v705 = vadd.f32 %v340, %v684
        %v706 = vadd.f32 %v341, %v684
        %v707 = vadd.f32 %v342, %v684
        %v708 = vadd.f32 %v343, %v684
        %v709 = vadd.f32 %v344, %v684
        %v710 = vadd.f32 %v345, %v684
        %v711 = vadd.f32 %v346, %v684
        %v712 = vadd.f32 %v347, %v684
        %v713 = vadd.f32 %v348, %v684
        %v714 = vadd.f32 %v349, %v684
        %v715 = vadd.f32 %v350, %v684
        %v716 = vadd.f32 %v351, %v684
        %v717 = vadd.f32 %v352, %v684
        %v718 = vpack.c.bf16 %v517, %v513
        %v719 = vpack.c.bf16 %v527, %v523
        %v720 = vpack.c.bf16 %v537, %v533
        %v721 = vpack.c.bf16 %v547, %v543
        %v722 = vpack.c.bf16 %v557, %v553
        %v723 = vpack.c.bf16 %v567, %v563
        %v724 = vpack.c.bf16 %v577, %v573
        %v725 = vpack.c.bf16 %v587, %v583
        %v726 = vpack.c.bf16 %v597, %v593
        %v727 = vpack.c.bf16 %v607, %v603
        %v728 = vpack.c.bf16 %v617, %v613
        %v729 = vpack.c.bf16 %v627, %v623
        %v730 = vpack.c.bf16 %v637, %v633
        %v731 = vpack.c.bf16 %v647, %v643
        %v732 = vpack.c.bf16 %v657, %v653
        %v733 = vpack.c.bf16 %v667, %v663
        %750 = vrot.lane.b32.xlu0 %v718, 64
        %v751 = vpop.permute.xlu0 %750
        %752 = vrot.lane.b32.xlu0 %v719, 64
        %v753 = vpop.permute.xlu0 %752
        %754 = vrot.lane.b32.xlu0 %v720, 64
        %v755 = vpop.permute.xlu0 %754
        %756 = vrot.lane.b32.xlu0 %v721, 64
        %v757 = vpop.permute.xlu0 %756
        %758 = vrot.lane.b32.xlu0 %v722, 64
        %v759 = vpop.permute.xlu0 %758
        %760 = vrot.lane.b32.xlu0 %v723, 64
        %v761 = vpop.permute.xlu0 %760
        %762 = vrot.lane.b32.xlu0 %v724, 64
        %v763 = vpop.permute.xlu0 %762
        %764 = vrot.lane.b32.xlu0 %v725, 64
        %v765 = vpop.permute.xlu0 %764
        %766 = vrot.lane.b32.xlu0 %v726, 64
        %v767 = vpop.permute.xlu0 %766
        %768 = vrot.lane.b32.xlu0 %v727, 64
        %v769 = vpop.permute.xlu0 %768
        %770 = vrot.lane.b32.xlu0 %v728, 64
        %v771 = vpop.permute.xlu0 %770
        %772 = vrot.lane.b32.xlu0 %v729, 64
        %v773 = vpop.permute.xlu0 %772
        %774 = vrot.lane.b32.xlu0 %v730, 64
        %v775 = vpop.permute.xlu0 %774
        %776 = vrot.lane.b32.xlu0 %v731, 64
        %v777 = vpop.permute.xlu0 %776
        %778 = vrot.lane.b32.xlu0 %v732, 64
        %v779 = vpop.permute.xlu0 %778
        %780 = vrot.lane.b32.xlu0 %v733, 64
        %v781 = vpop.permute.xlu0 %780
        %v783 = vsel %vm429, %v718, 0
        %v786 = vsel %vm429, %v719, 0
        %v789 = vsel %vm429, %v720, 0
        %v792 = vsel %vm429, %v721, 0
        %v795 = vsel %vm429, %v722, 0
        %v798 = vsel %vm429, %v723, 0
        %v801 = vsel %vm429, %v724, 0
        %v804 = vsel %vm429, %v725, 0
        %v807 = vsel %vm429, %v726, 0
        %v810 = vsel %vm429, %v727, 0
        %v813 = vsel %vm429, %v728, 0
        %v816 = vsel %vm429, %v729, 0
        %v819 = vsel %vm429, %v730, 0
        %v822 = vsel %vm429, %v731, 0
        %v825 = vsel %vm429, %v732, 0
        %v828 = vsel %vm429, %v733, 0
        %v831 = vsel %vm429, %v751, 0
        %v834 = vsel %vm429, %v753, 0
        %v837 = vsel %vm429, %v755, 0
        %v840 = vsel %vm429, %v757, 0
        %v843 = vsel %vm429, %v759, 0
        %v846 = vsel %vm429, %v761, 0
        %v849 = vsel %vm429, %v763, 0
        %v852 = vsel %vm429, %v765, 0
        %v855 = vsel %vm429, %v767, 0
        %v858 = vsel %vm429, %v769, 0
        %v861 = vsel %vm429, %v771, 0
        %v864 = vsel %vm429, %v773, 0
        %v867 = vsel %vm429, %v775, 0
        %v870 = vsel %vm429, %v777, 0
        %v873 = vsel %vm429, %v779, 0
        %v876 = vsel %vm429, %v781, 0
        %878 = vmatprep.subr.bf16.mxu0 0
        %879 = vmatpush1.bf16.xpose.msra.mxu0 %v831
        %880 = vmatprep.subr.bf16.mxu0 0
        %881 = vmatpush1.bf16.xpose.msra.mxu0 %v834
        %882 = vmatprep.subr.bf16.mxu0 0
        %883 = vmatpush1.bf16.xpose.msra.mxu0 %v837
        %884 = vmatprep.subr.bf16.mxu0 0
        %885 = vmatpush1.bf16.xpose.msra.mxu0 %v840
        %886 = vmatprep.subr.bf16.mxu0 0
        %887 = vmatpush1.bf16.xpose.msra.mxu0 %v843
        %888 = vmatprep.subr.bf16.mxu0 0
        %889 = vmatpush1.bf16.xpose.msra.mxu0 %v846
        %890 = vmatprep.subr.bf16.mxu0 0
        %891 = vmatpush1.bf16.xpose.msra.mxu0 %v849
        %892 = vmatprep.subr.bf16.mxu0 0
        %893 = vmatpush1.bf16.xpose.msra.mxu0 %v852
        %894 = vmatprep.subr.bf16.mxu0 0
        %895 = vmatpush1.bf16.xpose.msra.mxu0 %v855
        %896 = vmatprep.subr.bf16.mxu0 0
        %897 = vmatpush1.bf16.xpose.msra.mxu0 %v858
        %898 = vmatprep.subr.bf16.mxu0 0
        %899 = vmatpush1.bf16.xpose.msra.mxu0 %v861
        %900 = vmatprep.subr.bf16.mxu0 0
        %901 = vmatpush1.bf16.xpose.msra.mxu0 %v864
        %902 = vmatprep.subr.bf16.mxu0 0
        %903 = vmatpush1.bf16.xpose.msra.mxu0 %v867
        %904 = vmatprep.subr.bf16.mxu0 0
        %905 = vmatpush1.bf16.xpose.msra.mxu0 %v870
        %906 = vmatprep.subr.bf16.mxu0 0
        %907 = vmatpush1.bf16.xpose.msra.mxu0 %v873
        %908 = vmatprep.subr.bf16.mxu0 0
        %909 = vmatpush1.bf16.xpose.msra.mxu0 %v876
        %910 = vmatprep.mubr.bf16.mxu0 0
        %911 = vmatmul.mubr.bf16.gmra.mrb[0].mxu0 %v783
        %v912 = vpop.f32.mrb[0].mxu0
        %v913 = vadd.f32 0.0, %v912
        %v914 = vpop.f32.mrb[0].mxu0
        %v915 = vadd.f32 0.0, %v914
        %v916 = vpop.f32.mrb[0].mxu0
        %v917 = vadd.f32 0.0, %v916
        %v918 = vpop.f32.mrb[0].mxu0
        %v919 = vadd.f32 0.0, %v918
        %920 = vmatprep.mubr.bf16.mxu0 0
        %921 = vmatmul.mubr.bf16.gmra.mrb[0].mxu0 %v786
        %v922 = vpop.f32.mrb[0].mxu0
        %v923 = vadd.f32 0.0, %v922
        %v924 = vpop.f32.mrb[0].mxu0
        %v925 = vadd.f32 0.0, %v924
        %v926 = vpop.f32.mrb[0].mxu0
        %v927 = vadd.f32 0.0, %v926
        %v928 = vpop.f32.mrb[0].mxu0
        %v929 = vadd.f32 0.0, %v928
        %930 = vmatprep.mubr.bf16.mxu0 0
        %931 = vmatmul.mubr.bf16.gmra.mrb[0].mxu0 %v789
        %v932 = vpop.f32.mrb[0].mxu0
        %v933 = vadd.f32 0.0, %v932
        %v934 = vpop.f32.mrb[0].mxu0
        %v935 = vadd.f32 0.0, %v934
        %v936 = vpop.f32.mrb[0].mxu0
        %v937 = vadd.f32 0.0, %v936
        %v938 = vpop.f32.mrb[0].mxu0
        %v939 = vadd.f32 0.0, %v938
        %940 = vmatprep.mubr.bf16.mxu0 0
        %941 = vmatmul.mubr.bf16.gmra.mrb[0].mxu0 %v792
        %v942 = vpop.f32.mrb[0].mxu0
        %v943 = vadd.f32 0.0, %v942
        %v944 = vpop.f32.mrb[0].mxu0
        %v945 = vadd.f32 0.0, %v944
        %v946 = vpop.f32.mrb[0].mxu0
        %v947 = vadd.f32 0.0, %v946
        %v948 = vpop.f32.mrb[0].mxu0
        %v949 = vadd.f32 0.0, %v948
        %950 = vmatprep.mubr.bf16.mxu0 0
        %951 = vmatmul.mubr.bf16.gmra.mrb[0].mxu0 %v795
        %v952 = vpop.f32.mrb[0].mxu0
        %v953 = vadd.f32 0.0, %v952
        %v954 = vpop.f32.mrb[0].mxu0
        %v955 = vadd.f32 0.0, %v954
        %v956 = vpop.f32.mrb[0].mxu0
        %v957 = vadd.f32 0.0, %v956
        %v958 = vpop.f32.mrb[0].mxu0
        %v959 = vadd.f32 0.0, %v958
        %960 = vmatprep.mubr.bf16.mxu0 0
        %961 = vmatmul.mubr.bf16.gmra.mrb[0].mxu0 %v798
        %v962 = vpop.f32.mrb[0].mxu0
        %v963 = vadd.f32 0.0, %v962
        %v964 = vpop.f32.mrb[0].mxu0
        %v965 = vadd.f32 0.0, %v964
        %v966 = vpop.f32.mrb[0].mxu0
        %v967 = vadd.f32 0.0, %v966
        %v968 = vpop.f32.mrb[0].mxu0
        %v969 = vadd.f32 0.0, %v968
        %970 = vmatprep.mubr.bf16.mxu0 0
        %971 = vmatmul.mubr.bf16.gmra.mrb[0].mxu0 %v801
        %v972 = vpop.f32.mrb[0].mxu0
        %v973 = vadd.f32 0.0, %v972
        %v974 = vpop.f32.mrb[0].mxu0
        %v975 = vadd.f32 0.0, %v974
        %v976 = vpop.f32.mrb[0].mxu0
        %v977 = vadd.f32 0.0, %v976
        %v978 = vpop.f32.mrb[0].mxu0
        %v979 = vadd.f32 0.0, %v978
        %980 = vmatprep.mubr.bf16.mxu0 0
        %981 = vmatmul.mubr.bf16.gmra.mrb[0].mxu0 %v804
        %v982 = vpop.f32.mrb[0].mxu0
        %v983 = vadd.f32 0.0, %v982
        %v984 = vpop.f32.mrb[0].mxu0
        %v985 = vadd.f32 0.0, %v984
        %v986 = vpop.f32.mrb[0].mxu0
        %v987 = vadd.f32 0.0, %v986
        %v988 = vpop.f32.mrb[0].mxu0
        %v989 = vadd.f32 0.0, %v988
        %990 = vmatprep.mubr.bf16.mxu0 0
        %991 = vmatmul.mubr.bf16.gmra.mrb[0].mxu0 %v807
        %v992 = vpop.f32.mrb[0].mxu0
        %v993 = vadd.f32 0.0, %v992
        %v994 = vpop.f32.mrb[0].mxu0
        %v995 = vadd.f32 0.0, %v994
        %v996 = vpop.f32.mrb[0].mxu0
        %v997 = vadd.f32 0.0, %v996
        %v998 = vpop.f32.mrb[0].mxu0
        %v999 = vadd.f32 0.0, %v998
        %1000 = vmatprep.mubr.bf16.mxu0 0
        %1001 = vmatmul.mubr.bf16.gmra.mrb[0].mxu0 %v810
        %v1002 = vpop.f32.mrb[0].mxu0
        %v1003 = vadd.f32 0.0, %v1002
        %v1004 = vpop.f32.mrb[0].mxu0
        %v1005 = vadd.f32 0.0, %v1004
        %v1006 = vpop.f32.mrb[0].mxu0
        %v1007 = vadd.f32 0.0, %v1006
        %v1008 = vpop.f32.mrb[0].mxu0
        %v1009 = vadd.f32 0.0, %v1008
        %1010 = vmatprep.mubr.bf16.mxu0 0
        %1011 = vmatmul.mubr.bf16.gmra.mrb[0].mxu0 %v813
        %v1012 = vpop.f32.mrb[0].mxu0
        %v1013 = vadd.f32 0.0, %v1012
        %v1014 = vpop.f32.mrb[0].mxu0
        %v1015 = vadd.f32 0.0, %v1014
        %v1016 = vpop.f32.mrb[0].mxu0
        %v1017 = vadd.f32 0.0, %v1016
        %v1018 = vpop.f32.mrb[0].mxu0
        %v1019 = vadd.f32 0.0, %v1018
        %1020 = vmatprep.mubr.bf16.mxu0 0
        %1021 = vmatmul.mubr.bf16.gmra.mrb[0].mxu0 %v816
        %v1022 = vpop.f32.mrb[0].mxu0
        %v1023 = vadd.f32 0.0, %v1022
        %v1024 = vpop.f32.mrb[0].mxu0
        %v1025 = vadd.f32 0.0, %v1024
        %v1026 = vpop.f32.mrb[0].mxu0
        %v1027 = vadd.f32 0.0, %v1026
        %v1028 = vpop.f32.mrb[0].mxu0
        %v1029 = vadd.f32 0.0, %v1028
        %1030 = vmatprep.mubr.bf16.mxu0 0
        %1031 = vmatmul.mubr.bf16.gmra.mrb[0].mxu0 %v819
        %v1032 = vpop.f32.mrb[0].mxu0
        %v1033 = vadd.f32 0.0, %v1032
        %v1034 = vpop.f32.mrb[0].mxu0
        %v1035 = vadd.f32 0.0, %v1034
        %v1036 = vpop.f32.mrb[0].mxu0
        %v1037 = vadd.f32 0.0, %v1036
        %v1038 = vpop.f32.mrb[0].mxu0
        %v1039 = vadd.f32 0.0, %v1038
        %1040 = vmatprep.mubr.bf16.mxu0 0
        %1041 = vmatmul.mubr.bf16.gmra.mrb[0].mxu0 %v822
        %v1042 = vpop.f32.mrb[0].mxu0
        %v1043 = vadd.f32 0.0, %v1042
        %v1044 = vpop.f32.mrb[0].mxu0
        %v1045 = vadd.f32 0.0, %v1044
        %v1046 = vpop.f32.mrb[0].mxu0
        %v1047 = vadd.f32 0.0, %v1046
        %v1048 = vpop.f32.mrb[0].mxu0
        %v1049 = vadd.f32 0.0, %v1048
        %1050 = vmatprep.mubr.bf16.mxu0 0
        %1051 = vmatmul.mubr.bf16.gmra.mrb[0].mxu0 %v825
        %v1052 = vpop.f32.mrb[0].mxu0
        %v1053 = vadd.f32 0.0, %v1052
        %v1054 = vpop.f32.mrb[0].mxu0
        %v1055 = vadd.f32 0.0, %v1054
        %v1056 = vpop.f32.mrb[0].mxu0
        %v1057 = vadd.f32 0.0, %v1056
        %v1058 = vpop.f32.mrb[0].mxu0
        %v1059 = vadd.f32 0.0, %v1058
        %1060 = vmatprep.mubr.bf16.mxu0 0
        %1061 = vmatmul.mubr.bf16.gmra.mrb[0].mxu0 %v828
        %v1062 = vpop.f32.mrb[0].mxu0
        %v1063 = vadd.f32 0.0, %v1062
        %v1064 = vpop.f32.mrb[0].mxu0
        %v1065 = vadd.f32 0.0, %v1064
        %v1066 = vpop.f32.mrb[0].mxu0
        %v1067 = vadd.f32 0.0, %v1066
        %v1068 = vpop.f32.mrb[0].mxu0
        %v1069 = vadd.f32 0.0, %v1068
        %1070 = vdwg.mxu0
        %v1071 = vmax.f32 %v913, %v923
        %v1072 = vmax.f32 %v917, %v927
        %v1073 = vmax.f32 %v1071, %v933
        %v1074 = vmax.f32 %v1072, %v937
        %v1075 = vmax.f32 %v1073, %v943
        %v1076 = vmax.f32 %v1074, %v947
        %v1077 = vmax.f32 %v1075, %v953
        %v1078 = vmax.f32 %v1076, %v957
        %v1079 = vmax.f32 %v1077, %v963
        %v1080 = vmax.f32 %v1078, %v967
        %v1081 = vmax.f32 %v1079, %v973
        %v1082 = vmax.f32 %v1080, %v977
        %v1083 = vmax.f32 %v1081, %v983
        %v1084 = vmax.f32 %v1082, %v987
        %v1085 = vmax.f32 %v1083, %v993
        %v1086 = vmax.f32 %v1084, %v997
        %v1087 = vmax.f32 %v1085, %v1003
        %v1088 = vmax.f32 %v1086, %v1007
        %v1089 = vmax.f32 %v1087, %v1013
        %v1090 = vmax.f32 %v1088, %v1017
        %v1091 = vmax.f32 %v1089, %v1023
        %v1092 = vmax.f32 %v1090, %v1027
        %v1093 = vmax.f32 %v1091, %v1033
        %v1094 = vmax.f32 %v1092, %v1037
        %v1095 = vmax.f32 %v1093, %v1043
        %v1096 = vmax.f32 %v1094, %v1047
        %v1097 = vmax.f32 %v1095, %v1053
        %v1098 = vmax.f32 %v1096, %v1057
        %v1099 = vmax.f32 %v1097, %v1063
        %v1100 = vmax.f32 %v1098, %v1067
        %v1101 = vmax.f32 %v1099, %v1100
        %v1102 = vrot.slane %v1101, 4
        %v1103 = vmax.f32 %v1101, %v1102
        %v1104 = vrot.slane %v1103, 2
        %v1105 = vmax.f32 %v1103, %v1104
        %v1106 = vrot.slane %v1105, 1
        %v1107 = vmax.f32 %v1105, %v1106
        %v1108 = vmax.f32 %v915, %v925
        %v1109 = vmax.f32 %v919, %v929
        %v1110 = vmax.f32 %v1108, %v935
        %v1111 = vmax.f32 %v1109, %v939
        %v1112 = vmax.f32 %v1110, %v945
        %v1113 = vmax.f32 %v1111, %v949
        %v1114 = vmax.f32 %v1112, %v955
        %v1115 = vmax.f32 %v1113, %v959
        %v1116 = vmax.f32 %v1114, %v965
        %v1117 = vmax.f32 %v1115, %v969
        %v1118 = vmax.f32 %v1116, %v975
        %v1119 = vmax.f32 %v1117, %v979
        %v1120 = vmax.f32 %v1118, %v985
        %v1121 = vmax.f32 %v1119, %v989
        %v1122 = vmax.f32 %v1120, %v995
        %v1123 = vmax.f32 %v1121, %v999
        %v1124 = vmax.f32 %v1122, %v1005
        %v1125 = vmax.f32 %v1123, %v1009
        %v1126 = vmax.f32 %v1124, %v1015
        %v1127 = vmax.f32 %v1125, %v1019
        %v1128 = vmax.f32 %v1126, %v1025
        %v1129 = vmax.f32 %v1127, %v1029
        %v1130 = vmax.f32 %v1128, %v1035
        %v1131 = vmax.f32 %v1129, %v1039
        %v1132 = vmax.f32 %v1130, %v1045
        %v1133 = vmax.f32 %v1131, %v1049
        %v1134 = vmax.f32 %v1132, %v1055
        %v1135 = vmax.f32 %v1133, %v1059
        %v1136 = vmax.f32 %v1134, %v1065
        %v1137 = vmax.f32 %v1135, %v1069
        %v1138 = vmax.f32 %v1136, %v1137
        %v1139 = vrot.slane %v1138, 4
        %v1140 = vmax.f32 %v1138, %v1139
        %v1141 = vrot.slane %v1140, 2
        %v1142 = vmax.f32 %v1140, %v1141
        %v1143 = vrot.slane %v1142, 1
        %v1144 = vmax.f32 %v1142, %v1143
        %v1145 = vsub.f32 %v913, %v1107
        %v1146 = vsub.f32 %v915, %v1144
        %v1147 = vsub.f32 %v917, %v1107
        %v1148 = vsub.f32 %v919, %v1144
        %v1149 = vsub.f32 %v923, %v1107
        %v1150 = vsub.f32 %v925, %v1144
        %v1151 = vsub.f32 %v927, %v1107
        %v1152 = vsub.f32 %v929, %v1144
        %v1153 = vsub.f32 %v933, %v1107
        %v1154 = vsub.f32 %v935, %v1144
        %v1155 = vsub.f32 %v937, %v1107
        %v1156 = vsub.f32 %v939, %v1144
        %v1157 = vsub.f32 %v943, %v1107
        %v1158 = vsub.f32 %v945, %v1144
        %v1159 = vsub.f32 %v947, %v1107
        %v1160 = vsub.f32 %v949, %v1144
        %v1161 = vsub.f32 %v953, %v1107
        %v1162 = vsub.f32 %v955, %v1144
        %v1163 = vsub.f32 %v957, %v1107
        %v1164 = vsub.f32 %v959, %v1144
        %v1165 = vsub.f32 %v963, %v1107
        %v1166 = vsub.f32 %v965, %v1144
        %v1167 = vsub.f32 %v967, %v1107
        %v1168 = vsub.f32 %v969, %v1144
        %v1169 = vsub.f32 %v973, %v1107
        %v1170 = vsub.f32 %v975, %v1144
        %v1171 = vsub.f32 %v977, %v1107
        %v1172 = vsub.f32 %v979, %v1144
        %v1173 = vsub.f32 %v983, %v1107
        %v1174 = vsub.f32 %v985, %v1144
        %v1175 = vsub.f32 %v987, %v1107
        %v1176 = vsub.f32 %v989, %v1144
        %v1177 = vsub.f32 %v993, %v1107
        %v1178 = vsub.f32 %v995, %v1144
        %v1179 = vsub.f32 %v997, %v1107
        %v1180 = vsub.f32 %v999, %v1144
        %v1181 = vsub.f32 %v1003, %v1107
        %v1182 = vsub.f32 %v1005, %v1144
        %v1183 = vsub.f32 %v1007, %v1107
        %v1184 = vsub.f32 %v1009, %v1144
        %v1185 = vsub.f32 %v1013, %v1107
        %v1186 = vsub.f32 %v1015, %v1144
        %v1187 = vsub.f32 %v1017, %v1107
        %v1188 = vsub.f32 %v1019, %v1144
        %v1189 = vsub.f32 %v1023, %v1107
        %v1190 = vsub.f32 %v1025, %v1144
        %v1191 = vsub.f32 %v1027, %v1107
        %v1192 = vsub.f32 %v1029, %v1144
        %v1193 = vsub.f32 %v1033, %v1107
        %v1194 = vsub.f32 %v1035, %v1144
        %v1195 = vsub.f32 %v1037, %v1107
        %v1196 = vsub.f32 %v1039, %v1144
        %v1197 = vsub.f32 %v1043, %v1107
        %v1198 = vsub.f32 %v1045, %v1144
        %v1199 = vsub.f32 %v1047, %v1107
        %v1200 = vsub.f32 %v1049, %v1144
        %v1201 = vsub.f32 %v1053, %v1107
        %v1202 = vsub.f32 %v1055, %v1144
        %v1203 = vsub.f32 %v1057, %v1107
        %v1204 = vsub.f32 %v1059, %v1144
        %v1205 = vsub.f32 %v1063, %v1107
        %v1206 = vsub.f32 %v1065, %v1144
        %v1207 = vsub.f32 %v1067, %v1107
        %v1208 = vsub.f32 %v1069, %v1144
        %v1209 = vmul.f32 %v1145, 1.442695
        %v1210 = vpow.pop %v1209
        %v1211 = vmul.f32 %v1146, 1.442695
        %v1212 = vpow.pop %v1211
        %v1213 = vmul.f32 %v1147, 1.442695
        %v1214 = vpow.pop %v1213
        %v1215 = vmul.f32 %v1148, 1.442695
        %v1216 = vpow.pop %v1215
        %v1217 = vmul.f32 %v1149, 1.442695
        %v1218 = vpow.pop %v1217
        %v1219 = vmul.f32 %v1150, 1.442695
        %v1220 = vpow.pop %v1219
        %v1221 = vmul.f32 %v1151, 1.442695
        %v1222 = vpow.pop %v1221
        %v1223 = vmul.f32 %v1152, 1.442695
        %v1224 = vpow.pop %v1223
        %v1225 = vmul.f32 %v1153, 1.442695
        %v1226 = vpow.pop %v1225
        %v1227 = vmul.f32 %v1154, 1.442695
        %v1228 = vpow.pop %v1227
        %v1229 = vmul.f32 %v1155, 1.442695
        %v1230 = vpow.pop %v1229
        %v1231 = vmul.f32 %v1156, 1.442695
        %v1232 = vpow.pop %v1231
        %v1233 = vmul.f32 %v1157, 1.442695
        %v1234 = vpow.pop %v1233
        %v1235 = vmul.f32 %v1158, 1.442695
        %v1236 = vpow.pop %v1235
        %v1237 = vmul.f32 %v1159, 1.442695
        %v1238 = vpow.pop %v1237
        %v1239 = vmul.f32 %v1160, 1.442695
        %v1240 = vpow.pop %v1239
        %v1241 = vmul.f32 %v1161, 1.442695
        %v1242 = vpow.pop %v1241
        %v1243 = vmul.f32 %v1162, 1.442695
        %v1244 = vpow.pop %v1243
        %v1245 = vmul.f32 %v1163, 1.442695
        %v1246 = vpow.pop %v1245
        %v1247 = vmul.f32 %v1164, 1.442695
        %v1248 = vpow.pop %v1247
        %v1249 = vmul.f32 %v1165, 1.442695
        %v1250 = vpow.pop %v1249
        %v1251 = vmul.f32 %v1166, 1.442695
        %v1252 = vpow.pop %v1251
        %v1253 = vmul.f32 %v1167, 1.442695
        %v1254 = vpow.pop %v1253
        %v1255 = vmul.f32 %v1168, 1.442695
        %v1256 = vpow.pop %v1255
        %v1257 = vmul.f32 %v1169, 1.442695
        %v1258 = vpow.pop %v1257
        %v1259 = vmul.f32 %v1170, 1.442695
        %v1260 = vpow.pop %v1259
        %v1261 = vmul.f32 %v1171, 1.442695
        %v1262 = vpow.pop %v1261
        %v1263 = vmul.f32 %v1172, 1.442695
        %v1264 = vpow.pop %v1263
        %v1265 = vmul.f32 %v1173, 1.442695
        %v1266 = vpow.pop %v1265
        %v1267 = vmul.f32 %v1174, 1.442695
        %v1268 = vpow.pop %v1267
        %v1269 = vmul.f32 %v1175, 1.442695
        %v1270 = vpow.pop %v1269
        %v1271 = vmul.f32 %v1176, 1.442695
        %v1272 = vpow.pop %v1271
        %v1273 = vmul.f32 %v1177, 1.442695
        %v1274 = vpow.pop %v1273
        %v1275 = vmul.f32 %v1178, 1.442695
        %v1276 = vpow.pop %v1275
        %v1277 = vmul.f32 %v1179, 1.442695
        %v1278 = vpow.pop %v1277
        %v1279 = vmul.f32 %v1180, 1.442695
        %v1280 = vpow.pop %v1279
        %v1281 = vmul.f32 %v1181, 1.442695
        %v1282 = vpow.pop %v1281
        %v1283 = vmul.f32 %v1182, 1.442695
        %v1284 = vpow.pop %v1283
        %v1285 = vmul.f32 %v1183, 1.442695
        %v1286 = vpow.pop %v1285
        %v1287 = vmul.f32 %v1184, 1.442695
        %v1288 = vpow.pop %v1287
        %v1289 = vmul.f32 %v1185, 1.442695
        %v1290 = vpow.pop %v1289
        %v1291 = vmul.f32 %v1186, 1.442695
        %v1292 = vpow.pop %v1291
        %v1293 = vmul.f32 %v1187, 1.442695
        %v1294 = vpow.pop %v1293
        %v1295 = vmul.f32 %v1188, 1.442695
        %v1296 = vpow.pop %v1295
        %v1297 = vmul.f32 %v1189, 1.442695
        %v1298 = vpow.pop %v1297
        %v1299 = vmul.f32 %v1190, 1.442695
        %v1300 = vpow.pop %v1299
        %v1301 = vmul.f32 %v1191, 1.442695
        %v1302 = vpow.pop %v1301
        %v1303 = vmul.f32 %v1192, 1.442695
        %v1304 = vpow.pop %v1303
        %v1305 = vmul.f32 %v1193, 1.442695
        %v1306 = vpow.pop %v1305
        %v1307 = vmul.f32 %v1194, 1.442695
        %v1308 = vpow.pop %v1307
        %v1309 = vmul.f32 %v1195, 1.442695
        %v1310 = vpow.pop %v1309
        %v1311 = vmul.f32 %v1196, 1.442695
        %v1312 = vpow.pop %v1311
        %v1313 = vmul.f32 %v1197, 1.442695
        %v1314 = vpow.pop %v1313
        %v1315 = vmul.f32 %v1198, 1.442695
        %v1316 = vpow.pop %v1315
        %v1317 = vmul.f32 %v1199, 1.442695
        %v1318 = vpow.pop %v1317
        %v1319 = vmul.f32 %v1200, 1.442695
        %v1320 = vpow.pop %v1319
        %v1321 = vmul.f32 %v1201, 1.442695
        %v1322 = vpow.pop %v1321
        %v1323 = vmul.f32 %v1202, 1.442695
        %v1324 = vpow.pop %v1323
        %v1325 = vmul.f32 %v1203, 1.442695
        %v1326 = vpow.pop %v1325
        %v1327 = vmul.f32 %v1204, 1.442695
        %v1328 = vpow.pop %v1327
        %v1329 = vmul.f32 %v1205, 1.442695
        %v1330 = vpow.pop %v1329
        %v1331 = vmul.f32 %v1206, 1.442695
        %v1332 = vpow.pop %v1331
        %v1333 = vmul.f32 %v1207, 1.442695
        %v1334 = vpow.pop %v1333
        %v1335 = vmul.f32 %v1208, 1.442695
        %v1336 = vpow.pop %v1335
        %v1337 = vadd.f32 %v1210, %v1214
        %v1338 = vadd.f32 %v1337, %v1218
        %v1339 = vadd.f32 %v1338, %v1222
        %v1340 = vadd.f32 %v1339, %v1226
        %v1341 = vadd.f32 %v1340, %v1230
        %v1342 = vadd.f32 %v1341, %v1234
        %v1343 = vadd.f32 %v1342, %v1238
        %v1344 = vadd.f32 %v1343, %v1242
        %v1345 = vadd.f32 %v1344, %v1246
        %v1346 = vadd.f32 %v1345, %v1250
        %v1347 = vadd.f32 %v1346, %v1254
        %v1348 = vadd.f32 %v1347, %v1258
        %v1349 = vadd.f32 %v1348, %v1262
        %v1350 = vadd.f32 %v1349, %v1266
        %v1351 = vadd.f32 %v1350, %v1270
        %v1352 = vadd.f32 %v1351, %v1274
        %v1353 = vadd.f32 %v1352, %v1278
        %v1354 = vadd.f32 %v1353, %v1282
        %v1355 = vadd.f32 %v1354, %v1286
        %v1356 = vadd.f32 %v1355, %v1290
        %v1357 = vadd.f32 %v1356, %v1294
        %v1358 = vadd.f32 %v1357, %v1298
        %v1359 = vadd.f32 %v1358, %v1302
        %v1360 = vadd.f32 %v1359, %v1306
        %v1361 = vadd.f32 %v1360, %v1310
        %v1362 = vadd.f32 %v1361, %v1314
        %v1363 = vadd.f32 %v1362, %v1318
        %v1364 = vadd.f32 %v1363, %v1322
        %v1365 = vadd.f32 %v1364, %v1326
        %v1366 = vadd.f32 %v1365, %v1330
        %v1367 = vadd.f32 %v1366, %v1334
        %v1368 = vrot.slane %v1367, 4
        %v1369 = vadd.f32 %v1367, %v1368
        %v1370 = vrot.slane %v1369, 2
        %v1371 = vadd.f32 %v1369, %v1370
        %v1372 = vrot.slane %v1371, 1
        %v1373 = vadd.f32 %v1371, %v1372
        %v1374 = vadd.f32 %v1212, %v1216
        %v1375 = vadd.f32 %v1374, %v1220
        %v1376 = vadd.f32 %v1375, %v1224
        %v1377 = vadd.f32 %v1376, %v1228
        %v1378 = vadd.f32 %v1377, %v1232
        %v1379 = vadd.f32 %v1378, %v1236
        %v1380 = vadd.f32 %v1379, %v1240
        %v1381 = vadd.f32 %v1380, %v1244
        %v1382 = vadd.f32 %v1381, %v1248
        %v1383 = vadd.f32 %v1382, %v1252
        %v1384 = vadd.f32 %v1383, %v1256
        %v1385 = vadd.f32 %v1384, %v1260
        %v1386 = vadd.f32 %v1385, %v1264
        %v1387 = vadd.f32 %v1386, %v1268
        %v1388 = vadd.f32 %v1387, %v1272
        %v1389 = vadd.f32 %v1388, %v1276
        %v1390 = vadd.f32 %v1389, %v1280
        %v1391 = vadd.f32 %v1390, %v1284
        %v1392 = vadd.f32 %v1391, %v1288
        %v1393 = vadd.f32 %v1392, %v1292
        %v1394 = vadd.f32 %v1393, %v1296
        %v1395 = vadd.f32 %v1394, %v1300
        %v1396 = vadd.f32 %v1395, %v1304
        %v1397 = vadd.f32 %v1396, %v1308
        %v1398 = vadd.f32 %v1397, %v1312
        %v1399 = vadd.f32 %v1398, %v1316
        %v1400 = vadd.f32 %v1399, %v1320
        %v1401 = vadd.f32 %v1400, %v1324
        %v1402 = vadd.f32 %v1401, %v1328
        %v1403 = vadd.f32 %v1402, %v1332
        %v1404 = vadd.f32 %v1403, %v1336
        %v1405 = vrot.slane %v1404, 4
        %v1406 = vadd.f32 %v1404, %v1405
        %v1407 = vrot.slane %v1406, 2
        %v1408 = vadd.f32 %v1406, %v1407
        %v1409 = vrot.slane %v1408, 1
        %v1410 = vadd.f32 %v1408, %v1409
        %v1411 = vrcp.pop %v1373
        %v1412 = vmul.f32 %v1210, %v1411
        %v1413 = vrcp.pop %v1410
        %v1414 = vmul.f32 %v1212, %v1413
        %v1415 = vmul.f32 %v1214, %v1411
        %v1416 = vmul.f32 %v1216, %v1413
        %v1417 = vmul.f32 %v1218, %v1411
        %v1418 = vmul.f32 %v1220, %v1413
        %v1419 = vmul.f32 %v1222, %v1411
        %v1420 = vmul.f32 %v1224, %v1413
        %v1421 = vmul.f32 %v1226, %v1411
        %v1422 = vmul.f32 %v1228, %v1413
        %v1423 = vmul.f32 %v1230, %v1411
        %v1424 = vmul.f32 %v1232, %v1413
        %v1425 = vmul.f32 %v1234, %v1411
        %v1426 = vmul.f32 %v1236, %v1413
        %v1427 = vmul.f32 %v1238, %v1411
        %v1428 = vmul.f32 %v1240, %v1413
        %v1429 = vmul.f32 %v1242, %v1411
        %v1430 = vmul.f32 %v1244, %v1413
        %v1431 = vmul.f32 %v1246, %v1411
        %v1432 = vmul.f32 %v1248, %v1413
        %v1433 = vmul.f32 %v1250, %v1411
        %v1434 = vmul.f32 %v1252, %v1413
        %v1435 = vmul.f32 %v1254, %v1411
        %v1436 = vmul.f32 %v1256, %v1413
        %v1437 = vmul.f32 %v1258, %v1411
        %v1438 = vmul.f32 %v1260, %v1413
        %v1439 = vmul.f32 %v1262, %v1411
        %v1440 = vmul.f32 %v1264, %v1413
        %v1441 = vmul.f32 %v1266, %v1411
        %v1442 = vmul.f32 %v1268, %v1413
        %v1443 = vmul.f32 %v1270, %v1411
        %v1444 = vmul.f32 %v1272, %v1413
        %v1445 = vmul.f32 %v1274, %v1411
        %v1446 = vmul.f32 %v1276, %v1413
        %v1447 = vmul.f32 %v1278, %v1411
        %v1448 = vmul.f32 %v1280, %v1413
        %v1449 = vmul.f32 %v1282, %v1411
        %v1450 = vmul.f32 %v1284, %v1413
        %v1451 = vmul.f32 %v1286, %v1411
        %v1452 = vmul.f32 %v1288, %v1413
        %v1453 = vmul.f32 %v1290, %v1411
        %v1454 = vmul.f32 %v1292, %v1413
        %v1455 = vmul.f32 %v1294, %v1411
        %v1456 = vmul.f32 %v1296, %v1413
        %v1457 = vmul.f32 %v1298, %v1411
        %v1458 = vmul.f32 %v1300, %v1413
        %v1459 = vmul.f32 %v1302, %v1411
        %v1460 = vmul.f32 %v1304, %v1413
        %v1461 = vmul.f32 %v1306, %v1411
        %v1462 = vmul.f32 %v1308, %v1413
        %v1463 = vmul.f32 %v1310, %v1411
        %v1464 = vmul.f32 %v1312, %v1413
        %v1465 = vmul.f32 %v1314, %v1411
        %v1466 = vmul.f32 %v1316, %v1413
        %v1467 = vmul.f32 %v1318, %v1411
        %v1468 = vmul.f32 %v1320, %v1413
        %v1469 = vmul.f32 %v1322, %v1411
        %v1470 = vmul.f32 %v1324, %v1413
        %v1471 = vmul.f32 %v1326, %v1411
        %v1472 = vmul.f32 %v1328, %v1413
        %v1473 = vmul.f32 %v1330, %v1411
        %v1474 = vmul.f32 %v1332, %v1413
        %v1475 = vmul.f32 %v1334, %v1411
        %v1476 = vmul.f32 %v1336, %v1413
        %v1477 = vpack.c.bf16 %v1415, %v1412
        %v1478 = vpack.c.bf16 %v1416, %v1414
        %v1479 = vpack.c.bf16 %v1419, %v1417
        %v1480 = vpack.c.bf16 %v1420, %v1418
        %v1481 = vpack.c.bf16 %v1423, %v1421
        %v1482 = vpack.c.bf16 %v1424, %v1422
        %v1483 = vpack.c.bf16 %v1427, %v1425
        %v1484 = vpack.c.bf16 %v1428, %v1426
        %v1485 = vpack.c.bf16 %v1431, %v1429
        %v1486 = vpack.c.bf16 %v1432, %v1430
        %v1487 = vpack.c.bf16 %v1435, %v1433
        %v1488 = vpack.c.bf16 %v1436, %v1434
        %v1489 = vpack.c.bf16 %v1439, %v1437
        %v1490 = vpack.c.bf16 %v1440, %v1438
        %v1491 = vpack.c.bf16 %v1443, %v1441
        %v1492 = vpack.c.bf16 %v1444, %v1442
        %v1493 = vpack.c.bf16 %v1447, %v1445
        %v1494 = vpack.c.bf16 %v1448, %v1446
        %v1495 = vpack.c.bf16 %v1451, %v1449
        %v1496 = vpack.c.bf16 %v1452, %v1450
        %v1497 = vpack.c.bf16 %v1455, %v1453
        %v1498 = vpack.c.bf16 %v1456, %v1454
        %v1499 = vpack.c.bf16 %v1459, %v1457
        %v1500 = vpack.c.bf16 %v1460, %v1458
        %v1501 = vpack.c.bf16 %v1463, %v1461
        %v1502 = vpack.c.bf16 %v1464, %v1462
        %v1503 = vpack.c.bf16 %v1467, %v1465
        %v1504 = vpack.c.bf16 %v1468, %v1466
        %v1505 = vpack.c.bf16 %v1471, %v1469
        %v1506 = vpack.c.bf16 %v1472, %v1470
        %v1507 = vpack.c.bf16 %v1475, %v1473
        %v1508 = vpack.c.bf16 %v1476, %v1474
        %v1509 = vpack.c.bf16 %v519, %v515
        %v1510 = vpack.c.bf16 %v529, %v525
        %v1511 = vpack.c.bf16 %v539, %v535
        %v1512 = vpack.c.bf16 %v549, %v545
        %v1513 = vpack.c.bf16 %v559, %v555
        %v1514 = vpack.c.bf16 %v569, %v565
        %v1515 = vpack.c.bf16 %v579, %v575
        %v1516 = vpack.c.bf16 %v589, %v585
        %v1517 = vpack.c.bf16 %v599, %v595
        %v1518 = vpack.c.bf16 %v609, %v605
        %v1519 = vpack.c.bf16 %v619, %v615
        %v1520 = vpack.c.bf16 %v629, %v625
        %v1521 = vpack.c.bf16 %v639, %v635
        %v1522 = vpack.c.bf16 %v649, %v645
        %v1523 = vpack.c.bf16 %v659, %v655
        %v1524 = vpack.c.bf16 %v669, %v665
        %1525 = vmatprep.subr.bf16.mxu0 0
        %1526 = vmatpush1.bf16.msra.mxu0 %v1509
        %1527 = vmatprep.subr.bf16.mxu0 0
        %1528 = vmatpush1.bf16.msra.mxu0 %v1510
        %1529 = vmatprep.subr.bf16.mxu0 0
        %1530 = vmatpush1.bf16.msra.mxu0 %v1511
        %1531 = vmatprep.subr.bf16.mxu0 0
        %1532 = vmatpush1.bf16.msra.mxu0 %v1512
        %1533 = vmatprep.subr.bf16.mxu0 0
        %1534 = vmatpush1.bf16.msra.mxu0 %v1513
        %1535 = vmatprep.subr.bf16.mxu0 0
        %1536 = vmatpush1.bf16.msra.mxu0 %v1514
        %1537 = vmatprep.subr.bf16.mxu0 0
        %1538 = vmatpush1.bf16.msra.mxu0 %v1515
        %1539 = vmatprep.subr.bf16.mxu0 0
        %1540 = vmatpush1.bf16.msra.mxu0 %v1516
        %1541 = vmatprep.subr.bf16.mxu0 0
        %1542 = vmatpush1.bf16.msra.mxu0 %v1517
        %1543 = vmatprep.subr.bf16.mxu0 0
        %1544 = vmatpush1.bf16.msra.mxu0 %v1518
        %1545 = vmatprep.subr.bf16.mxu0 0
        %1546 = vmatpush1.bf16.msra.mxu0 %v1519
        %1547 = vmatprep.subr.bf16.mxu0 0
        %1548 = vmatpush1.bf16.msra.mxu0 %v1520
        %1549 = vmatprep.subr.bf16.mxu0 0
        %1550 = vmatpush1.bf16.msra.mxu0 %v1521
        %1551 = vmatprep.subr.bf16.mxu0 0
        %1552 = vmatpush1.bf16.msra.mxu0 %v1522
        %1553 = vmatprep.subr.bf16.mxu0 0
        %1554 = vmatpush1.bf16.msra.mxu0 %v1523
        %1555 = vmatprep.subr.bf16.mxu0 0
        %1556 = vmatpush1.bf16.msra.mxu0 %v1524
        %1557 = vmatprep.mubr.bf16.mxu0 %v1478
        %1558 = vmatmul.mubr.bf16.gmra.mrb[0].mxu0 %v1477
        %v1559 = vpop.f32.mrb[0].mxu0
        %v1560 = vadd.f32 0.0, %v1559
        %v1561 = vpop.f32.mrb[0].mxu0
        %v1562 = vpop.f32.mrb[0].mxu0
        %v1563 = vadd.f32 0.0, %v1562
        %v1564 = vpop.f32.mrb[0].mxu0
        %1565 = vmatprep.mubr.bf16.mxu0 %v1480
        %1566 = vmatmul.mubr.bf16.gmra.mrb[0].mxu0 %v1479
        %v1567 = vpop.f32.mrb[0].mxu0
        %v1568 = vadd.f32 0.0, %v1567
        %v1569 = vpop.f32.mrb[0].mxu0
        %v1570 = vpop.f32.mrb[0].mxu0
        %v1571 = vadd.f32 0.0, %v1570
        %v1572 = vpop.f32.mrb[0].mxu0
        %1573 = vmatprep.mubr.bf16.mxu0 %v1482
        %1574 = vmatmul.mubr.bf16.gmra.mrb[0].mxu0 %v1481
        %v1575 = vpop.f32.mrb[0].mxu0
        %v1576 = vadd.f32 0.0, %v1575
        %v1577 = vpop.f32.mrb[0].mxu0
        %v1578 = vpop.f32.mrb[0].mxu0
        %v1579 = vadd.f32 0.0, %v1578
        %v1580 = vpop.f32.mrb[0].mxu0
        %1581 = vmatprep.mubr.bf16.mxu0 %v1484
        %1582 = vmatmul.mubr.bf16.gmra.mrb[0].mxu0 %v1483
        %v1583 = vpop.f32.mrb[0].mxu0
        %v1584 = vadd.f32 0.0, %v1583
        %v1585 = vpop.f32.mrb[0].mxu0
        %v1586 = vpop.f32.mrb[0].mxu0
        %v1587 = vadd.f32 0.0, %v1586
        %v1588 = vpop.f32.mrb[0].mxu0
        %1589 = vmatprep.mubr.bf16.mxu0 %v1486
        %1590 = vmatmul.mubr.bf16.gmra.mrb[0].mxu0 %v1485
        %v1591 = vpop.f32.mrb[0].mxu0
        %v1592 = vadd.f32 0.0, %v1591
        %v1593 = vpop.f32.mrb[0].mxu0
        %v1594 = vpop.f32.mrb[0].mxu0
        %v1595 = vadd.f32 0.0, %v1594
        %v1596 = vpop.f32.mrb[0].mxu0
        %1597 = vmatprep.mubr.bf16.mxu0 %v1488
        %1598 = vmatmul.mubr.bf16.gmra.mrb[0].mxu0 %v1487
        %v1599 = vpop.f32.mrb[0].mxu0
        %v1600 = vadd.f32 0.0, %v1599
        %v1601 = vpop.f32.mrb[0].mxu0
        %v1602 = vpop.f32.mrb[0].mxu0
        %v1603 = vadd.f32 0.0, %v1602
        %v1604 = vpop.f32.mrb[0].mxu0
        %1605 = vmatprep.mubr.bf16.mxu0 %v1490
        %1606 = vmatmul.mubr.bf16.gmra.mrb[0].mxu0 %v1489
        %v1607 = vpop.f32.mrb[0].mxu0
        %v1608 = vadd.f32 0.0, %v1607
        %v1609 = vpop.f32.mrb[0].mxu0
        %v1610 = vpop.f32.mrb[0].mxu0
        %v1611 = vadd.f32 0.0, %v1610
        %v1612 = vpop.f32.mrb[0].mxu0
        %1613 = vmatprep.mubr.bf16.mxu0 %v1492
        %1614 = vmatmul.mubr.bf16.gmra.mrb[0].mxu0 %v1491
        %v1615 = vpop.f32.mrb[0].mxu0
        %v1616 = vadd.f32 0.0, %v1615
        %v1617 = vpop.f32.mrb[0].mxu0
        %v1618 = vpop.f32.mrb[0].mxu0
        %v1619 = vadd.f32 0.0, %v1618
        %v1620 = vpop.f32.mrb[0].mxu0
        %1621 = vmatprep.mubr.bf16.mxu0 %v1494
        %1622 = vmatmul.mubr.bf16.gmra.mrb[0].mxu0 %v1493
        %v1623 = vpop.f32.mrb[0].mxu0
        %v1624 = vadd.f32 0.0, %v1623
        %v1625 = vpop.f32.mrb[0].mxu0
        %v1626 = vpop.f32.mrb[0].mxu0
        %v1627 = vadd.f32 0.0, %v1626
        %v1628 = vpop.f32.mrb[0].mxu0
        %1629 = vmatprep.mubr.bf16.mxu0 %v1496
        %1630 = vmatmul.mubr.bf16.gmra.mrb[0].mxu0 %v1495
        %v1631 = vpop.f32.mrb[0].mxu0
        %v1632 = vadd.f32 0.0, %v1631
        %v1633 = vpop.f32.mrb[0].mxu0
        %v1634 = vpop.f32.mrb[0].mxu0
        %v1635 = vadd.f32 0.0, %v1634
        %v1636 = vpop.f32.mrb[0].mxu0
        %1637 = vmatprep.mubr.bf16.mxu0 %v1498
        %1638 = vmatmul.mubr.bf16.gmra.mrb[0].mxu0 %v1497
        %v1639 = vpop.f32.mrb[0].mxu0
        %v1640 = vadd.f32 0.0, %v1639
        %v1641 = vpop.f32.mrb[0].mxu0
        %v1642 = vpop.f32.mrb[0].mxu0
        %v1643 = vadd.f32 0.0, %v1642
        %v1644 = vpop.f32.mrb[0].mxu0
        %1645 = vmatprep.mubr.bf16.mxu0 %v1500
        %1646 = vmatmul.mubr.bf16.gmra.mrb[0].mxu0 %v1499
        %v1647 = vpop.f32.mrb[0].mxu0
        %v1648 = vadd.f32 0.0, %v1647
        %v1649 = vpop.f32.mrb[0].mxu0
        %v1650 = vpop.f32.mrb[0].mxu0
        %v1651 = vadd.f32 0.0, %v1650
        %v1652 = vpop.f32.mrb[0].mxu0
        %1653 = vmatprep.mubr.bf16.mxu0 %v1502
        %1654 = vmatmul.mubr.bf16.gmra.mrb[0].mxu0 %v1501
        %v1655 = vpop.f32.mrb[0].mxu0
        %v1656 = vadd.f32 0.0, %v1655
        %v1657 = vpop.f32.mrb[0].mxu0
        %v1658 = vpop.f32.mrb[0].mxu0
        %v1659 = vadd.f32 0.0, %v1658
        %v1660 = vpop.f32.mrb[0].mxu0
        %1661 = vmatprep.mubr.bf16.mxu0 %v1504
        %1662 = vmatmul.mubr.bf16.gmra.mrb[0].mxu0 %v1503
        %v1663 = vpop.f32.mrb[0].mxu0
        %v1664 = vadd.f32 0.0, %v1663
        %v1665 = vpop.f32.mrb[0].mxu0
        %v1666 = vpop.f32.mrb[0].mxu0
        %v1667 = vadd.f32 0.0, %v1666
        %v1668 = vpop.f32.mrb[0].mxu0
        %1669 = vmatprep.mubr.bf16.mxu0 %v1506
        %1670 = vmatmul.mubr.bf16.gmra.mrb[0].mxu0 %v1505
        %v1671 = vpop.f32.mrb[0].mxu0
        %v1672 = vadd.f32 0.0, %v1671
        %v1673 = vpop.f32.mrb[0].mxu0
        %v1674 = vpop.f32.mrb[0].mxu0
        %v1675 = vadd.f32 0.0, %v1674
        %v1676 = vpop.f32.mrb[0].mxu0
        %1677 = vmatprep.mubr.bf16.mxu0 %v1508
        %1678 = vmatmul.mubr.bf16.gmra.mrb[0].mxu0 %v1507
        %v1679 = vpop.f32.mrb[0].mxu0
        %v1680 = vadd.f32 0.0, %v1679
        %v1681 = vpop.f32.mrb[0].mxu0
        %v1682 = vpop.f32.mrb[0].mxu0
        %v1683 = vadd.f32 0.0, %v1682
        %v1684 = vpop.f32.mrb[0].mxu0
        %1685 = vdwg.mxu0
        %v1686 = vpack.c.bf16 %v1563, %v1560
        %v1687 = vpack.c.bf16 %v1571, %v1568
        %v1688 = vpack.c.bf16 %v1579, %v1576
        %v1689 = vpack.c.bf16 %v1587, %v1584
        %v1690 = vpack.c.bf16 %v1595, %v1592
        %v1691 = vpack.c.bf16 %v1603, %v1600
        %v1692 = vpack.c.bf16 %v1611, %v1608
        %v1693 = vpack.c.bf16 %v1619, %v1616
        %v1694 = vpack.c.bf16 %v1627, %v1624
        %v1695 = vpack.c.bf16 %v1635, %v1632
        %v1696 = vpack.c.bf16 %v1643, %v1640
        %v1697 = vpack.c.bf16 %v1651, %v1648
        %v1698 = vpack.c.bf16 %v1659, %v1656
        %v1699 = vpack.c.bf16 %v1667, %v1664
        %v1700 = vpack.c.bf16 %v1675, %v1672
        %v1701 = vpack.c.bf16 %v1683, %v1680
        %v1710 = vunpack.c.l.b16 %v671
        %v1711 = vunpack.c.l.b16 %v672
        %v1712 = vunpack.c.l.b16 %v673
        %v1713 = vunpack.c.l.b16 %v674
        %v1714 = vunpack.c.l.b16 %v675
        %v1715 = vunpack.c.l.b16 %v676
        %v1716 = vunpack.c.l.b16 %v677
        %v1717 = vunpack.c.l.b16 %v678
        %v1718 = vpack.c.b16 %v1711, %v1710
        %v1719 = vpack.c.b16 %v1713, %v1712
        %v1720 = vpack.c.b16 %v1715, %v1714
        %v1721 = vpack.c.b16 %v1717, %v1716
        %v1727 = vsel %vm429, %v1686, 0
        %v1730 = vsel %vm429, %v1687, 0
        %v1733 = vsel %vm429, %v1688, 0
        %v1736 = vsel %vm429, %v1689, 0
        %v1739 = vsel %vm429, %v1690, 0
        %v1742 = vsel %vm429, %v1691, 0
        %v1745 = vsel %vm429, %v1692, 0
        %v1748 = vsel %vm429, %v1693, 0
        %v1751 = vsel %vm429, %v1694, 0
        %v1754 = vsel %vm429, %v1695, 0
        %v1757 = vsel %vm429, %v1696, 0
        %v1760 = vsel %vm429, %v1697, 0
        %v1763 = vsel %vm429, %v1698, 0
        %v1766 = vsel %vm429, %v1699, 0
        %v1769 = vsel %vm429, %v1700, 0
        %v1772 = vsel %vm429, %v1701, 0
        %1774 = vmatprep.subr.bf16.mxu0 0
        %1775 = vmatpush1.bf16.msra.mxu0 %v1718
        %1776 = vmatprep.subr.bf16.mxu0 0
        %1777 = vmatpush1.bf16.msra.mxu0 %v1719
        %1778 = vmatprep.subr.bf16.mxu0 0
        %1779 = vmatpush1.bf16.msra.mxu0 %v1720
        %1780 = vmatprep.subr.bf16.mxu0 0
        %1781 = vmatpush1.bf16.msra.mxu0 %v1721
        %1782 = vmatprep.subr.bf16.mxu0 0
        %1783 = vmatpush1.bf16.msra.mxu0 0
        %1784 = vmatprep.subr.bf16.mxu0 0
        %1785 = vmatpush1.bf16.msra.mxu0 0
        %1786 = vmatprep.subr.bf16.mxu0 0
        %1787 = vmatpush1.bf16.msra.mxu0 0
        %1788 = vmatprep.subr.bf16.mxu0 0
        %1789 = vmatpush1.bf16.msra.mxu0 0
        %1790 = vmatprep.subr.bf16.mxu0 0
        %1791 = vmatpush1.bf16.msra.mxu0 0
        %1792 = vmatprep.subr.bf16.mxu0 0
        %1793 = vmatpush1.bf16.msra.mxu0 0
        %1794 = vmatprep.subr.bf16.mxu0 0
        %1795 = vmatpush1.bf16.msra.mxu0 0
        %1796 = vmatprep.subr.bf16.mxu0 0
        %1797 = vmatpush1.bf16.msra.mxu0 0
        %1798 = vmatprep.subr.bf16.mxu0 0
        %1799 = vmatpush1.bf16.msra.mxu0 0
        %1800 = vmatprep.subr.bf16.mxu0 0
        %1801 = vmatpush1.bf16.msra.mxu0 0
        %1802 = vmatprep.subr.bf16.mxu0 0
        %1803 = vmatpush1.bf16.msra.mxu0 0
        %1804 = vmatprep.subr.bf16.mxu0 0
        %1805 = vmatpush1.bf16.msra.mxu0 0
        %1806 = vmatprep.mubr.bf16.mxu0 0
        %1807 = vmatmul.mubr.bf16.gmra.mrb[0].mxu0 %v1727
        %v1808 = vpop.f32.mrb[0].mxu0
        %v1809 = vadd.f32 0.0, %v1808
        %v1810 = vpop.f32.mrb[0].mxu0
        %v1811 = vpop.f32.mrb[0].mxu0
        %v1812 = vadd.f32 0.0, %v1811
        %v1813 = vpop.f32.mrb[0].mxu0
        %1814 = vmatprep.mubr.bf16.mxu0 0
        %1815 = vmatmul.mubr.bf16.gmra.mrb[0].mxu0 %v1730
        %v1816 = vpop.f32.mrb[0].mxu0
        %v1817 = vadd.f32 0.0, %v1816
        %v1818 = vpop.f32.mrb[0].mxu0
        %v1819 = vpop.f32.mrb[0].mxu0
        %v1820 = vadd.f32 0.0, %v1819
        %v1821 = vpop.f32.mrb[0].mxu0
        %1822 = vmatprep.mubr.bf16.mxu0 0
        %1823 = vmatmul.mubr.bf16.gmra.mrb[0].mxu0 %v1733
        %v1824 = vpop.f32.mrb[0].mxu0
        %v1825 = vadd.f32 0.0, %v1824
        %v1826 = vpop.f32.mrb[0].mxu0
        %v1827 = vpop.f32.mrb[0].mxu0
        %v1828 = vadd.f32 0.0, %v1827
        %v1829 = vpop.f32.mrb[0].mxu0
        %1830 = vmatprep.mubr.bf16.mxu0 0
        %1831 = vmatmul.mubr.bf16.gmra.mrb[0].mxu0 %v1736
        %v1832 = vpop.f32.mrb[0].mxu0
        %v1833 = vadd.f32 0.0, %v1832
        %v1834 = vpop.f32.mrb[0].mxu0
        %v1835 = vpop.f32.mrb[0].mxu0
        %v1836 = vadd.f32 0.0, %v1835
        %v1837 = vpop.f32.mrb[0].mxu0
        %1838 = vmatprep.mubr.bf16.mxu0 0
        %1839 = vmatmul.mubr.bf16.gmra.mrb[0].mxu0 %v1739
        %v1840 = vpop.f32.mrb[0].mxu0
        %v1841 = vadd.f32 0.0, %v1840
        %v1842 = vpop.f32.mrb[0].mxu0
        %v1843 = vpop.f32.mrb[0].mxu0
        %v1844 = vadd.f32 0.0, %v1843
        %v1845 = vpop.f32.mrb[0].mxu0
        %1846 = vmatprep.mubr.bf16.mxu0 0
        %1847 = vmatmul.mubr.bf16.gmra.mrb[0].mxu0 %v1742
        %v1848 = vpop.f32.mrb[0].mxu0
        %v1849 = vadd.f32 0.0, %v1848
        %v1850 = vpop.f32.mrb[0].mxu0
        %v1851 = vpop.f32.mrb[0].mxu0
        %v1852 = vadd.f32 0.0, %v1851
        %v1853 = vpop.f32.mrb[0].mxu0
        %1854 = vmatprep.mubr.bf16.mxu0 0
        %1855 = vmatmul.mubr.bf16.gmra.mrb[0].mxu0 %v1745
        %v1856 = vpop.f32.mrb[0].mxu0
        %v1857 = vadd.f32 0.0, %v1856
        %v1858 = vpop.f32.mrb[0].mxu0
        %v1859 = vpop.f32.mrb[0].mxu0
        %v1860 = vadd.f32 0.0, %v1859
        %v1861 = vpop.f32.mrb[0].mxu0
        %1862 = vmatprep.mubr.bf16.mxu0 0
        %1863 = vmatmul.mubr.bf16.gmra.mrb[0].mxu0 %v1748
        %v1864 = vpop.f32.mrb[0].mxu0
        %v1865 = vadd.f32 0.0, %v1864
        %v1866 = vpop.f32.mrb[0].mxu0
        %v1867 = vpop.f32.mrb[0].mxu0
        %v1868 = vadd.f32 0.0, %v1867
        %v1869 = vpop.f32.mrb[0].mxu0
        %1870 = vmatprep.mubr.bf16.mxu0 0
        %1871 = vmatmul.mubr.bf16.gmra.mrb[0].mxu0 %v1751
        %v1872 = vpop.f32.mrb[0].mxu0
        %v1873 = vadd.f32 0.0, %v1872
        %v1874 = vpop.f32.mrb[0].mxu0
        %v1875 = vpop.f32.mrb[0].mxu0
        %v1876 = vadd.f32 0.0, %v1875
        %v1877 = vpop.f32.mrb[0].mxu0
        %1878 = vmatprep.mubr.bf16.mxu0 0
        %1879 = vmatmul.mubr.bf16.gmra.mrb[0].mxu0 %v1754
        %v1880 = vpop.f32.mrb[0].mxu0
        %v1881 = vadd.f32 0.0, %v1880
        %v1882 = vpop.f32.mrb[0].mxu0
        %v1883 = vpop.f32.mrb[0].mxu0
        %v1884 = vadd.f32 0.0, %v1883
        %v1885 = vpop.f32.mrb[0].mxu0
        %1886 = vmatprep.mubr.bf16.mxu0 0
        %1887 = vmatmul.mubr.bf16.gmra.mrb[0].mxu0 %v1757
        %v1888 = vpop.f32.mrb[0].mxu0
        %v1889 = vadd.f32 0.0, %v1888
        %v1890 = vpop.f32.mrb[0].mxu0
        %v1891 = vpop.f32.mrb[0].mxu0
        %v1892 = vadd.f32 0.0, %v1891
        %v1893 = vpop.f32.mrb[0].mxu0
        %1894 = vmatprep.mubr.bf16.mxu0 0
        %1895 = vmatmul.mubr.bf16.gmra.mrb[0].mxu0 %v1760
        %v1896 = vpop.f32.mrb[0].mxu0
        %v1897 = vadd.f32 0.0, %v1896
        %v1898 = vpop.f32.mrb[0].mxu0
        %v1899 = vpop.f32.mrb[0].mxu0
        %v1900 = vadd.f32 0.0, %v1899
        %v1901 = vpop.f32.mrb[0].mxu0
        %1902 = vmatprep.mubr.bf16.mxu0 0
        %1903 = vmatmul.mubr.bf16.gmra.mrb[0].mxu0 %v1763
        %v1904 = vpop.f32.mrb[0].mxu0
        %v1905 = vadd.f32 0.0, %v1904
        %v1906 = vpop.f32.mrb[0].mxu0
        %v1907 = vpop.f32.mrb[0].mxu0
        %v1908 = vadd.f32 0.0, %v1907
        %v1909 = vpop.f32.mrb[0].mxu0
        %1910 = vmatprep.mubr.bf16.mxu0 0
        %1911 = vmatmul.mubr.bf16.gmra.mrb[0].mxu0 %v1766
        %v1912 = vpop.f32.mrb[0].mxu0
        %v1913 = vadd.f32 0.0, %v1912
        %v1914 = vpop.f32.mrb[0].mxu0
        %v1915 = vpop.f32.mrb[0].mxu0
        %v1916 = vadd.f32 0.0, %v1915
        %v1917 = vpop.f32.mrb[0].mxu0
        %1918 = vmatprep.mubr.bf16.mxu0 0
        %1919 = vmatmul.mubr.bf16.gmra.mrb[0].mxu0 %v1769
        %v1920 = vpop.f32.mrb[0].mxu0
        %v1921 = vadd.f32 0.0, %v1920
        %v1922 = vpop.f32.mrb[0].mxu0
        %v1923 = vpop.f32.mrb[0].mxu0
        %v1924 = vadd.f32 0.0, %v1923
        %v1925 = vpop.f32.mrb[0].mxu0
        %1926 = vmatprep.mubr.bf16.mxu0 0
        %1927 = vmatmul.mubr.bf16.gmra.mrb[0].mxu0 %v1772
        %v1928 = vpop.f32.mrb[0].mxu0
        %v1929 = vadd.f32 0.0, %v1928
        %v1930 = vpop.f32.mrb[0].mxu0
        %v1931 = vpop.f32.mrb[0].mxu0
        %v1932 = vadd.f32 0.0, %v1931
        %v1933 = vpop.f32.mrb[0].mxu0
        %1934 = vdwg.mxu0
        %v1935 = vadd.f32 %v686, %v1809
        %v1936 = vadd.f32 %v687, %v1812
        %v1937 = vadd.f32 %v688, %v1817
        %v1938 = vadd.f32 %v689, %v1820
        %v1939 = vadd.f32 %v690, %v1825
        %v1940 = vadd.f32 %v691, %v1828
        %v1941 = vadd.f32 %v692, %v1833
        %v1942 = vadd.f32 %v693, %v1836
        %v1943 = vadd.f32 %v694, %v1841
        %v1944 = vadd.f32 %v695, %v1844
        %v1945 = vadd.f32 %v696, %v1849
        %v1946 = vadd.f32 %v697, %v1852
        %v1947 = vadd.f32 %v698, %v1857
        %v1948 = vadd.f32 %v699, %v1860
        %v1949 = vadd.f32 %v700, %v1865
        %v1950 = vadd.f32 %v701, %v1868
        %v1951 = vadd.f32 %v702, %v1873
        %v1952 = vadd.f32 %v703, %v1876
        %v1953 = vadd.f32 %v704, %v1881
        %v1954 = vadd.f32 %v705, %v1884
        %v1955 = vadd.f32 %v706, %v1889
        %v1956 = vadd.f32 %v707, %v1892
        %v1957 = vadd.f32 %v708, %v1897
        %v1958 = vadd.f32 %v709, %v1900
        %v1959 = vadd.f32 %v710, %v1905
        %v1960 = vadd.f32 %v711, %v1908
        %v1961 = vadd.f32 %v712, %v1913
        %v1962 = vadd.f32 %v713, %v1916
        %v1963 = vadd.f32 %v714, %v1921
        %v1964 = vadd.f32 %v715, %v1924
        %v1965 = vadd.f32 %v716, %v1929
        %v1966 = vadd.f32 %v717, %v1932
        %1967 = vxpose.xlu0.b32.start [1/16] %v1935, 128
        %1968 = vxpose.xlu0.b32.cont [2/16] %v1936, 128
        %1969 = vxpose.xlu0.b32.cont [3/16] %v1937, 128
        %1970 = vxpose.xlu0.b32.cont [4/16] %v1938, 128
        %1971 = vxpose.xlu0.b32.cont [5/16] %v1939, 128
        %1972 = vxpose.xlu0.b32.cont [6/16] %v1940, 128
        %1973 = vxpose.xlu0.b32.cont [7/16] %v1941, 128
        %1974 = vxpose.xlu0.b32.cont [8/16] %v1942, 128
        %1975 = vxpose.xlu0.b32.cont [9/16] %v1943, 128
        %1976 = vxpose.xlu0.b32.cont [10/16] %v1944, 128
        %1977 = vxpose.xlu0.b32.cont [11/16] %v1945, 128
        %1978 = vxpose.xlu0.b32.cont [12/16] %v1946, 128
        %1979 = vxpose.xlu0.b32.cont [13/16] %v1947, 128
        %1980 = vxpose.xlu0.b32.cont [14/16] %v1948, 128
        %1981 = vxpose.xlu0.b32.cont [15/16] %v1949, 128
        %1982 = vxpose.xlu0.b32.end [16/16] %v1950, 128
        %v1983 = vpop.trf.xlu0
        %v1984 = vpop.trf.xlu0
        %v1985 = vpop.trf.xlu0
        %v1986 = vpop.trf.xlu0
        %v1987 = vpop.trf.xlu0
        %v1988 = vpop.trf.xlu0
        %v1989 = vpop.trf.xlu0
        %v1990 = vpop.trf.xlu0
        %v1991 = vpop.trf.xlu0
        %v1992 = vpop.trf.xlu0
        %v1993 = vpop.trf.xlu0
        %v1994 = vpop.trf.xlu0
        %v1995 = vpop.trf.xlu0
        %v1996 = vpop.trf.xlu0
        %v1997 = vpop.trf.xlu0
        %v1998 = vpop.trf.xlu0
        %1999 = vxpose.xlu0.b32.start [1/16] %v1951, 128
        %2000 = vxpose.xlu0.b32.cont [2/16] %v1952, 128
        %2001 = vxpose.xlu0.b32.cont [3/16] %v1953, 128
        %2002 = vxpose.xlu0.b32.cont [4/16] %v1954, 128
        %2003 = vxpose.xlu0.b32.cont [5/16] %v1955, 128
        %2004 = vxpose.xlu0.b32.cont [6/16] %v1956, 128
        %2005 = vxpose.xlu0.b32.cont [7/16] %v1957, 128
        %2006 = vxpose.xlu0.b32.cont [8/16] %v1958, 128
        %2007 = vxpose.xlu0.b32.cont [9/16] %v1959, 128
        %2008 = vxpose.xlu0.b32.cont [10/16] %v1960, 128
        %2009 = vxpose.xlu0.b32.cont [11/16] %v1961, 128
        %2010 = vxpose.xlu0.b32.cont [12/16] %v1962, 128
        %2011 = vxpose.xlu0.b32.cont [13/16] %v1963, 128
        %2012 = vxpose.xlu0.b32.cont [14/16] %v1964, 128
        %2013 = vxpose.xlu0.b32.cont [15/16] %v1965, 128
        %2014 = vxpose.xlu0.b32.end [16/16] %v1966, 128
        %v2015 = vpop.trf.xlu0
        %v2016 = vpop.trf.xlu0
        %v2017 = vpop.trf.xlu0
        %v2018 = vpop.trf.xlu0
        %v2019 = vpop.trf.xlu0
        %v2020 = vpop.trf.xlu0
        %v2021 = vpop.trf.xlu0
        %v2022 = vpop.trf.xlu0
        %v2023 = vpop.trf.xlu0
        %v2024 = vpop.trf.xlu0
        %v2025 = vpop.trf.xlu0
        %v2026 = vpop.trf.xlu0
        %v2027 = vpop.trf.xlu0
        %v2028 = vpop.trf.xlu0
        %v2029 = vpop.trf.xlu0
        %v2030 = vpop.trf.xlu0
        %2031 = vst [vmem:[%s271] sm:$0xff] %v1983
        %2032 = vst [vmem:[%s271 + $0x8] sm:$0xff] %v2015
        %2033 = vst [vmem:[%s271 + $0x10] sm:$0xff] %v1984
        %2034 = vst [vmem:[%s271 + $0x18] sm:$0xff] %v2016
        %2035 = vst [vmem:[%s271 + $0x20] sm:$0xff] %v1985
        %2036 = vst [vmem:[%s271 + $0x28] sm:$0xff] %v2017
        %2037 = vst [vmem:[%s271 + $0x30] sm:$0xff] %v1986
        %2038 = vst [vmem:[%s271 + $0x38] sm:$0xff] %v2018
        %2039 = vst [vmem:[%s271 + $0x40] sm:$0xff] %v1987
        %2040 = vst [vmem:[%s271 + $0x48] sm:$0xff] %v2019
        %2041 = vst [vmem:[%s271 + $0x50] sm:$0xff] %v1988
        %2042 = vst [vmem:[%s271 + $0x58] sm:$0xff] %v2020
        %2043 = vst [vmem:[%s271 + $0x60] sm:$0xff] %v1989
        %2044 = vst [vmem:[%s271 + $0x68] sm:$0xff] %v2021
        %2045 = vst [vmem:[%s271 + $0x70] sm:$0xff] %v1990
        %2046 = vst [vmem:[%s271 + $0x78] sm:$0xff] %v2022
        %s2047 = sand.u32 %s141, 1
        %s2048 = scalar_lea.sflag [#allocation4], %s2047
        %s2049 = sand.u32 %s141, 1
        %s2050 = smul.addr %s2049, 128
        %s2051 = scalar_lea.vmem [#allocation8], %s2050
        // Predicated region
        $region53: #{tpu_custom_call.1} parent=39 // pred_check
          %p2052 = pneg %p151
        $region54: #{tpu_custom_call.1} parent=39 // pred_check_branch
          %2054 = sbr.rel (%p2052) target = $region56
        $region55: #{tpu_custom_call.1} parent=39 // pred_region
          %s2056 = ssub.s32 2048, 2048
          %2057 = vsyncadd %s2048, %s2056
          %s2058 = smul.addr %s23, 16
          %s2059 = smul.addr %s2058, 128
          %s2060 = scalar_lea.hbm %s5, %s2059
          %s2061 = sshll.u32 %s2051, 4
          %s2062 = int_to_ptr.vmem [resolvable:$true] %s2061
          %2067 = dma.vmem_to_hbm [thread:$0]  %s2062, 2048, %s2060, %s2048, 256, 256, 16
        $region56: #{tpu_custom_call.1} parent=39 // pred_fallthru
          _
      $region40: #{tpu_custom_call.1} parent=5 // pred_fallthru
        _
      %p2068 = scmp.le.s32.totalorder 2, %s18
      // Predicated region
      $region57: #{tpu_custom_call.1} parent=5 // pred_check
        %p2069 = pneg %p2068
      $region58: #{tpu_custom_call.1} parent=5 // pred_check_branch
        %2071 = sbr.rel (%p2069) target = $region60
      $region59: #{tpu_custom_call.1} parent=5 // pred_region
        %s2072 = ssub.s32 %s18, 2
        // Predicated region
        $region61: #{tpu_custom_call.1} parent=59 // pred_check
          %p2073 = pneg %p157
        $region62: #{tpu_custom_call.1} parent=59 // pred_check_branch
          %2075 = sbr.rel (%p2073) target = $region64
        $region63: #{tpu_custom_call.1} parent=59 // pred_region
          %s2076 = sand.u32 %s142, 1
          %s2077 = scalar_lea.sflag [#allocation4], %s2076
          %s2078 = sand.u32 %s142, 1
          %s2079 = smul.addr %s2078, 128
          %s2080 = scalar_lea.vmem [#allocation8], %s2079
          %2081 = dma.done %s2077, 2048
        $region64: #{tpu_custom_call.1} parent=59 // pred_fallthru
          _
      $region60: #{tpu_custom_call.1} parent=5 // pred_fallthru
        _
    $region6: #{tpu_custom_call.1} parent=1 // loop_footer
      %s22 = sadd.s32 1, %s18
    $region7: #{tpu_custom_call.1} parent=1 // loop_footer_branch
      %17 = sbr.rel target = $region3
    $region8: #{tpu_custom_call.1} parent=1 // loop_exit
      _
    %2082 = vsyncpa [#allocation3], 1
    %s2083 = scalar_lea.sflag [#allocation3], 1
    %2084 = vsyncpa %s2083, 1
    %2085 = vsyncpa [#allocation6], 1
    %2086 = vsyncpa [#allocation4], 1
    %s2087 = scalar_lea.sflag [#allocation4], 1
    %2088 = vsyncpa %s2087, 1

</llo_original>
